<compile_context>
chip_gen: v7x
topology: tpu7x:2x2x1
jax: 0.10.0
libtpu: 0.0.40
codegen_flags: <defaults>
</compile_context>

<pallas_src>
import jax
import jax.numpy as jnp
from jax.experimental import pallas as pl
from jax.experimental.pallas import tpu as pltpu


def _cdiv(a, b):
    return (a + b - 1) // b


def _round_up(x, m):
    return _cdiv(x, m) * m


def _vmem_capacity_bytes():
    """Per-core VMEM capacity; conservative fallback if the query is unavailable."""
    try:
        return int(pltpu.get_tpu_info().vmem_capacity_bytes)
    except Exception:
        return 64 << 20  # v7x per-TensorCore VMEM (smallest current generation)


def _vmem_bytes(TB, D, H, lane_dense=True, single_buffer_weights=True):
    """Rough VMEM footprint estimate (lane/sublane padded) for one grid step."""
    Dp = max(_round_up(D, 128), 128)
    Hp = max(_round_up(H, 128), 128)
    wbuf = 1 if single_buffer_weights else 2
    resident = wbuf * (D * Hp * 2          # w1  bf16
                       + 3 * H * Hp * 2    # w2..w4 bf16 (stacked)
                       + 4 * 8 * Hp * 4    # b1..b4 f32 (sublane padded)
                       + 8 * Hp * 4)       # w5 f32
    x_io = 2 * TB * Dp * 4                 # x f32, double-buffered
    o_io = 2 * TB * (4 if lane_dense else 512)   # column layout lane-pads to 128
    act = TB * Hp * (4 + 2 + 4)            # h f32 + bf16 copy + next f32 (mid-layer peak)
    return resident + x_io + o_io + act


def _choose_batch_tile(B, D, H, block_batch, vmem_budget):
    """Pick the batch tile TB (multiple of 128) and padded batch Bp = grid * TB."""
    # Several grid steps when B is large: v7x megacore wants >= 2 steps per
    # TensorCore and the x/out pipeline needs >= 2 steps to fill. Never split
    # tiny batches (grid=1 for the demo sizes).
    nt = max(_cdiv(B, block_batch), min(8, _cdiv(B, 512)))
    TB = min(_round_up(_cdiv(B, nt), 128), _round_up(block_batch, 128))
    # Shrink TB (never a matmul dim) until resident weights + activations fit.
    while TB > 128 and _vmem_bytes(TB, D, H) > vmem_budget:
        TB -= 128
    nt = _cdiv(B, TB)
    return TB, nt * TB


def five_regressor_kernel(x_ref, w1_ref, w_mid_ref, b_all_ref, w5_ref, b5_ref, o_ref):
    # Layer 1: in-kernel f32->bf16 cast (no separate HBM cast pass), MXU matmul
    # with f32 accumulation, bias + ReLU in f32.
    x = x_ref[...].astype(jnp.bfloat16)
    h = jnp.dot(x, w1_ref[...], preferred_element_type=jnp.float32)
    h = jnp.maximum(h + b_all_ref[0], 0.0)

    # Layers 2-4: identical [H, H] layers, weights stacked in one resident ref.
    for k in range(3):  # static unroll
        h = jnp.dot(h.astype(jnp.bfloat16), w_mid_ref[k],
                    preferred_element_type=jnp.float32)
        h = jnp.maximum(h + b_all_ref[k + 1], 0.0)

    # Layer 5 (H -> 1): VPU multiply + lane reduce (avoids a 1-lane MXU tile),
    # scalar bias from SMEM. The (TB, 1) column is relaid out into the
    # lane-dense (TB//128, 128) output block so stores are unmasked.
    # TODO(synk): if a bundle dump ever shows the XLU binding on this reduce,
    # pre-reduce as (TB, H//128, 128).sum(axis=1) on the VPU first.
    col = jnp.sum(h * w5_ref[...], axis=-1, keepdims=True) + b5_ref[0, 0]
    o_ref[...] = col.reshape(o_ref.shape).astype(o_ref.dtype)


def _const(*idx):
    return lambda i: idx


def _build_forward(TB, Bp, D, H, vmem_limit, *, lane_dense, single_buffer_weights):
    nt = Bp // TB
    g = TB // 128
    wmode = {"pipeline_mode": pl.Buffered(1)} if single_buffer_weights else {}

    if lane_dense:
        # (grid, TB//128, 128): the last two block dims equal the array dims,
        # so the (8,128) rule is always satisfied; grid tiles the leading dim.
        out_shape = jax.ShapeDtypeStruct((nt, g, 128), jnp.float32)
        out_spec = pl.BlockSpec((None, g, 128), lambda i: (i, 0, 0))
    else:
        out_shape = jax.ShapeDtypeStruct((Bp, 1), jnp.float32)
        out_spec = pl.BlockSpec((TB, 1), lambda i: (i, 0))

    return pl.pallas_call(
        five_regressor_kernel,
        out_shape=out_shape,
        grid=(nt,),
        in_specs=[
            pl.BlockSpec((TB, D), lambda i: (i, 0)),                    # x (pipelined)
            pl.BlockSpec((D, H), _const(0, 0), **wmode),                # w1
            pl.BlockSpec((3, H, H), _const(0, 0, 0), **wmode),          # w2..w4 stacked
            pl.BlockSpec((4, 1, H), _const(0, 0, 0), **wmode),          # b1..b4 stacked
            pl.BlockSpec((1, H), _const(0, 0), **wmode),                # w5 row (f32)
            pl.BlockSpec((1, 1), _const(0, 0),
                         memory_space=pltpu.MemorySpace.SMEM),          # b5 scalar
        ],
        out_specs=out_spec,
        compiler_params=pltpu.CompilerParams(
            dimension_semantics=("parallel",),      # megacore sharding on v7x
            vmem_limit_bytes=int(vmem_limit)),
    )


def pack_params(params):
    """One-time weight packing (transpose / stack / bf16 cast), hoisted out of
    the per-call path so the weights are truly resident."""
    w1 = jnp.asarray(params["fc1"][0], jnp.float32).T.astype(jnp.bfloat16)       # [D, H]
    w_mid = jnp.stack([jnp.asarray(params[f"fc{i}"][0], jnp.float32).T
                       for i in (2, 3, 4)]).astype(jnp.bfloat16)                 # [3, H, H]
    b_all = jnp.stack([jnp.asarray(params[f"fc{i}"][1], jnp.float32)
                       for i in (1, 2, 3, 4)])[:, None, :]                       # [4, 1, H]
    w5 = jnp.asarray(params["fc5"][0], jnp.float32)                              # [1, H]
    b5 = jnp.asarray(params["fc5"][1], jnp.float32).reshape(1, 1)                # [1, 1]
    return dict(w1=w1, w_mid=w_mid, b_all=b_all, w5=w5, b5=b5)


def five_regressor_forward(x, packed, *, block_batch=None):
    """x: [B, input_size] float32; packed: output of pack_params. Returns [B, 1] f32."""
    B, D = x.shape
    H = packed["w1"].shape[1]

    cap = _vmem_capacity_bytes()
    if block_batch is None:
        # Larger default tile on 128 MiB parts (v5e/v6e); conservative on v7x.
        block_batch = 4096 if cap >= (100 << 20) else 2048
    budget = int(0.70 * cap)

    TB, Bp = _choose_batch_tile(B, D, H, block_batch, budget)
    if Bp != B:
        x = jnp.pad(x, ((0, Bp - B), (0, 0)))   # < one tile of padding, only if needed

    # Explicit scoped-VMEM limit (worst-case estimate so it also covers fallbacks).
    worst = _vmem_bytes(TB, D, H, lane_dense=False, single_buffer_weights=False)
    vmem_limit = min(max(int(1.5 * worst) + (4 << 20), 32 << 20), cap)

    args = (x, packed["w1"], packed["w_mid"], packed["b_all"],
            packed["w5"], packed["b5"])

    # Primary config: lane-dense output + single-buffered resident weights.
    # Fallbacks keep the script portable to Pallas/Mosaic versions lacking
    # pipeline_mode=Buffered or the in-kernel column->row relayout.
    last_err = None
    for lane_dense, single_buf in ((True, True), (True, False), (False, False)):
        try:
            call = _build_forward(TB, Bp, D, H, vmem_limit,
                                  lane_dense=lane_dense,
                                  single_buffer_weights=single_buf)
            out = call(*args)
            return out.reshape(Bp, 1)[:B]       # free metadata reshape + slice
        except Exception as e:                  # pragma: no cover - version fallback
            last_err = e
    raise last_err


def init_params(key, input_size, hidden_size):
    """Deterministic init mirroring nn.Linear shapes (uniform +/- 1/sqrt(fan_in))."""
    dims = [(input_size, hidden_size),
            (hidden_size, hidden_size),
            (hidden_size, hidden_size),
            (hidden_size, hidden_size),
            (hidden_size, 1)]
    params = {}
    for i, (fan_in, fan_out) in enumerate(dims, start=1):
        key, kw, kb = jax.random.split(key, 3)
        bound = 1.0 / (fan_in ** 0.5)
        w = jax.random.uniform(kw, (fan_out, fan_in), jnp.float32, -bound, bound)
        b = jax.random.uniform(kb, (fan_out,), jnp.float32, -bound, bound)
        params[f"fc{i}"] = (w, b)
    return params


def reference_forward_f32(x, params):
    h = x
    for i in range(1, 5):
        w, b = params[f"fc{i}"]
        h = jnp.maximum(h @ w.T + b, 0.0)
    w, b = params["fc5"]
    return h @ w.T + b


def reference_forward_bf16(x, params):
    """Mirrors kernel numerics: bf16 matmul inputs, f32 accumulation, f32 tail."""
    h = x.astype(jnp.bfloat16)
    for i in range(1, 5):
        w, b = params[f"fc{i}"]
        h = jnp.dot(h.astype(jnp.bfloat16), w.T.astype(jnp.bfloat16),
                    preferred_element_type=jnp.float32)
        h = jnp.maximum(h + b, 0.0)
    w5, b5 = params["fc5"]
    return jnp.sum(h * w5.astype(jnp.float32), axis=-1, keepdims=True) + b5


if __name__ == "__main__":
    key = jax.random.PRNGKey(0)
    key, kx = jax.random.split(key)

    batch, input_size, hidden_size = 8, 16, 32
    x = jax.random.normal(kx, (batch, input_size), jnp.float32)
    params = init_params(key, input_size, hidden_size)
    packed = pack_params(params)   # one-time weight packing (not per-forward)

    out = jax.block_until_ready(five_regressor_forward(x, packed))

    ref_bf16 = reference_forward_bf16(x, params)   # same numerics as the kernel
    ref_f32 = reference_forward_f32(x, params)     # exact f32 module semantics

    assert out.shape == (batch, 1)
    assert jnp.allclose(out, ref_bf16, atol=5e-3, rtol=5e-3), (
        f"max abs err vs bf16-mirrored ref: {float(jnp.max(jnp.abs(out - ref_bf16)))}")
    assert jnp.allclose(out, ref_f32, atol=5e-2, rtol=5e-2), (
        f"max abs err vs f32 ref: {float(jnp.max(jnp.abs(out - ref_f32)))}")

    print("KERNEL_OK")
</pallas_src>

<mosaic_0001>
module attributes {stable_mosaic.version = 11 : i64} {
  func.func @five_regressor_kernel(%arg0: i32, %arg1: memref<128x16xf32, #tpu.memory_space<vmem>>, %arg2: memref<16x32xbf16, #tpu.memory_space<vmem>>, %arg3: memref<3x32x32xbf16, #tpu.memory_space<vmem>>, %arg4: memref<4x1x32xf32, #tpu.memory_space<vmem>>, %arg5: memref<1x32xf32, #tpu.memory_space<vmem>>, %arg6: memref<1x1xf32, #tpu.memory_space<smem>>, %arg7: memref<1x1x128xf32, #tpu.memory_space<vmem>>) attributes {dimension_semantics = [#tpu.dimension_semantics<parallel>], iteration_bounds = array<i64: 1>, scalar_prefetch = 0 : i64, scratch_operands = 0 : i64, tpu.core_type = #tpu.core_type<tc>, window_params = [{transform_indices = @transform_0, window_bounds = array<i64: 128, 16>}, {pipeline_mode = #tpu.pipeline_mode<synchronous>, transform_indices = @transform_1, window_bounds = array<i64: 16, 32>}, {pipeline_mode = #tpu.pipeline_mode<synchronous>, transform_indices = @transform_2, window_bounds = array<i64: 3, 32, 32>}, {pipeline_mode = #tpu.pipeline_mode<synchronous>, transform_indices = @transform_3, window_bounds = array<i64: 4, 1, 32>}, {pipeline_mode = #tpu.pipeline_mode<synchronous>, transform_indices = @transform_4, window_bounds = array<i64: 1, 32>}, {transform_indices = @transform_5, window_bounds = array<i64: 1, 1>}, {transform_indices = @transform_6, window_bounds = array<i64: 1, 1, 128>}]} {
    %c0 = arith.constant 0 : index
    %c0_0 = arith.constant 0 : index
    %0 = vector.load %arg1[%c0, %c0_0] : memref<128x16xf32, #tpu.memory_space<vmem>>, vector<128x16xf32>
    %1 = arith.truncf %0 : vector<128x16xf32> to vector<128x16xbf16>
    %c0_1 = arith.constant 0 : index
    %c0_2 = arith.constant 0 : index
    %2 = vector.load %arg2[%c0_1, %c0_2] : memref<16x32xbf16, #tpu.memory_space<vmem>>, vector<16x32xbf16>
    %cst = arith.constant dense<0.000000e+00> : vector<128x32xf32>
    %3 = tpu.matmul %1, %2, %cst {dimension_numbers = #tpu.dot_dimension_numbers<[1], [0], [0], [1], [0, 0, 1, 1], [], []>} : vector<128x16xbf16>, vector<16x32xbf16>, vector<128x32xf32> -> vector<128x32xf32>
    %c0_3 = arith.constant 0 : index
    %c0_4 = arith.constant 0 : index
    %c0_5 = arith.constant 0 : index
    %4 = vector.load %arg4[%c0_3, %c0_4, %c0_5] : memref<4x1x32xf32, #tpu.memory_space<vmem>>, vector<1x1x32xf32>
    %5 = vector.shape_cast %4 : vector<1x1x32xf32> to vector<1x32xf32>
    %6 = vector.broadcast %5 : vector<1x32xf32> to vector<128x32xf32>
    %7 = arith.addf %3, %6 : vector<128x32xf32>
    %cst_6 = arith.constant 0.000000e+00 : f32
    %8 = vector.broadcast %cst_6 : f32 to vector<128x32xf32>
    %9 = arith.maximumf %7, %8 : vector<128x32xf32>
    %10 = arith.truncf %9 : vector<128x32xf32> to vector<128x32xbf16>
    %c0_7 = arith.constant 0 : index
    %c0_8 = arith.constant 0 : index
    %c0_9 = arith.constant 0 : index
    %11 = vector.load %arg3[%c0_7, %c0_8, %c0_9] : memref<3x32x32xbf16, #tpu.memory_space<vmem>>, vector<1x32x32xbf16>
    %12 = vector.shape_cast %11 : vector<1x32x32xbf16> to vector<32x32xbf16>
    %cst_10 = arith.constant dense<0.000000e+00> : vector<128x32xf32>
    %13 = tpu.matmul %10, %12, %cst_10 {dimension_numbers = #tpu.dot_dimension_numbers<[1], [0], [0], [1], [0, 0, 1, 1], [], []>} : vector<128x32xbf16>, vector<32x32xbf16>, vector<128x32xf32> -> vector<128x32xf32>
    %c1 = arith.constant 1 : index
    %c0_11 = arith.constant 0 : index
    %c0_12 = arith.constant 0 : index
    %14 = vector.load %arg4[%c1, %c0_11, %c0_12] : memref<4x1x32xf32, #tpu.memory_space<vmem>>, vector<1x1x32xf32>
    %15 = vector.shape_cast %14 : vector<1x1x32xf32> to vector<1x32xf32>
    %16 = vector.broadcast %15 : vector<1x32xf32> to vector<128x32xf32>
    %17 = arith.addf %13, %16 : vector<128x32xf32>
    %cst_13 = arith.constant 0.000000e+00 : f32
    %18 = vector.broadcast %cst_13 : f32 to vector<128x32xf32>
    %19 = arith.maximumf %17, %18 : vector<128x32xf32>
    %20 = arith.truncf %19 : vector<128x32xf32> to vector<128x32xbf16>
    %c1_14 = arith.constant 1 : index
    %c0_15 = arith.constant 0 : index
    %c0_16 = arith.constant 0 : index
    %21 = vector.load %arg3[%c1_14, %c0_15, %c0_16] : memref<3x32x32xbf16, #tpu.memory_space<vmem>>, vector<1x32x32xbf16>
    %22 = vector.shape_cast %21 : vector<1x32x32xbf16> to vector<32x32xbf16>
    %cst_17 = arith.constant dense<0.000000e+00> : vector<128x32xf32>
    %23 = tpu.matmul %20, %22, %cst_17 {dimension_numbers = #tpu.dot_dimension_numbers<[1], [0], [0], [1], [0, 0, 1, 1], [], []>} : vector<128x32xbf16>, vector<32x32xbf16>, vector<128x32xf32> -> vector<128x32xf32>
    %c2 = arith.constant 2 : index
    %c0_18 = arith.constant 0 : index
    %c0_19 = arith.constant 0 : index
    %24 = vector.load %arg4[%c2, %c0_18, %c0_19] : memref<4x1x32xf32, #tpu.memory_space<vmem>>, vector<1x1x32xf32>
    %25 = vector.shape_cast %24 : vector<1x1x32xf32> to vector<1x32xf32>
    %26 = vector.broadcast %25 : vector<1x32xf32> to vector<128x32xf32>
    %27 = arith.addf %23, %26 : vector<128x32xf32>
    %cst_20 = arith.constant 0.000000e+00 : f32
    %28 = vector.broadcast %cst_20 : f32 to vector<128x32xf32>
    %29 = arith.maximumf %27, %28 : vector<128x32xf32>
    %30 = arith.truncf %29 : vector<128x32xf32> to vector<128x32xbf16>
    %c2_21 = arith.constant 2 : index
    %c0_22 = arith.constant 0 : index
    %c0_23 = arith.constant 0 : index
    %31 = vector.load %arg3[%c2_21, %c0_22, %c0_23] : memref<3x32x32xbf16, #tpu.memory_space<vmem>>, vector<1x32x32xbf16>
    %32 = vector.shape_cast %31 : vector<1x32x32xbf16> to vector<32x32xbf16>
    %cst_24 = arith.constant dense<0.000000e+00> : vector<128x32xf32>
    %33 = tpu.matmul %30, %32, %cst_24 {dimension_numbers = #tpu.dot_dimension_numbers<[1], [0], [0], [1], [0, 0, 1, 1], [], []>} : vector<128x32xbf16>, vector<32x32xbf16>, vector<128x32xf32> -> vector<128x32xf32>
    %c3 = arith.constant 3 : index
    %c0_25 = arith.constant 0 : index
    %c0_26 = arith.constant 0 : index
    %34 = vector.load %arg4[%c3, %c0_25, %c0_26] : memref<4x1x32xf32, #tpu.memory_space<vmem>>, vector<1x1x32xf32>
    %35 = vector.shape_cast %34 : vector<1x1x32xf32> to vector<1x32xf32>
    %36 = vector.broadcast %35 : vector<1x32xf32> to vector<128x32xf32>
    %37 = arith.addf %33, %36 : vector<128x32xf32>
    %cst_27 = arith.constant 0.000000e+00 : f32
    %38 = vector.broadcast %cst_27 : f32 to vector<128x32xf32>
    %39 = arith.maximumf %37, %38 : vector<128x32xf32>
    %c0_28 = arith.constant 0 : index
    %c0_29 = arith.constant 0 : index
    %40 = vector.load %arg5[%c0_28, %c0_29] : memref<1x32xf32, #tpu.memory_space<vmem>>, vector<1x32xf32>
    %41 = vector.broadcast %40 : vector<1x32xf32> to vector<128x32xf32>
    %42 = arith.mulf %39, %41 : vector<128x32xf32>
    %cst_30 = arith.constant dense<0.000000e+00> : vector<128xf32>
    %43 = vector.multi_reduction <add>, %42, %cst_30 [1] : vector<128x32xf32> to vector<128xf32>
    %44 = vector.shape_cast %43 : vector<128xf32> to vector<128x1xf32>
    %c0_31 = arith.constant 0 : index
    %c0_32 = arith.constant 0 : index
    %45 = memref.load %arg6[%c0_31, %c0_32] : memref<1x1xf32, #tpu.memory_space<smem>>
    %46 = vector.broadcast %45 : f32 to vector<128x1xf32>
    %47 = arith.addf %44, %46 : vector<128x1xf32>
    %48 = vector.shape_cast %47 : vector<128x1xf32> to vector<1x128xf32>
    %c0_33 = arith.constant 0 : index
    %c0_34 = arith.constant 0 : index
    %c0_35 = arith.constant 0 : index
    %49 = vector.load %arg7[%c0_33, %c0_34, %c0_35] : memref<1x1x128xf32, #tpu.memory_space<vmem>>, vector<1x1x128xf32>
    %50 = vector.shape_cast %49 : vector<1x1x128xf32> to vector<1x128xf32>
    %51 = vector.shape_cast %48 : vector<1x128xf32> to vector<1x1x128xf32>
    tpu.vector_store %arg7[%c0_33, %c0_34, %c0_35], %51 {strides = array<i32>} : memref<1x1x128xf32, #tpu.memory_space<vmem>>, vector<1x1x128xf32>,
    return
  }
  func.func @transform_0(%arg0: i32) -> (i32, i32) {
    %c0_i32 = arith.constant 0 : i32
    %c0_i32_0 = arith.constant 0 : i32
    return %arg0, %c0_i32 : i32, i32
  }
  func.func @transform_1(%arg0: i32) -> (i32, i32) {
    %c0_i32 = arith.constant 0 : i32
    %c0_i32_0 = arith.constant 0 : i32
    %c0_i32_1 = arith.constant 0 : i32
    return %c0_i32, %c0_i32_0 : i32, i32
  }
  func.func @transform_2(%arg0: i32) -> (i32, i32, i32) {
    %c0_i32 = arith.constant 0 : i32
    %c0_i32_0 = arith.constant 0 : i32
    %c0_i32_1 = arith.constant 0 : i32
    %c0_i32_2 = arith.constant 0 : i32
    return %c0_i32, %c0_i32_0, %c0_i32_1 : i32, i32, i32
  }
  func.func @transform_3(%arg0: i32) -> (i32, i32, i32) {
    %c0_i32 = arith.constant 0 : i32
    %c0_i32_0 = arith.constant 0 : i32
    %c0_i32_1 = arith.constant 0 : i32
    %c0_i32_2 = arith.constant 0 : i32
    return %c0_i32, %c0_i32_0, %c0_i32_1 : i32, i32, i32
  }
  func.func @transform_4(%arg0: i32) -> (i32, i32) {
    %c0_i32 = arith.constant 0 : i32
    %c0_i32_0 = arith.constant 0 : i32
    %c0_i32_1 = arith.constant 0 : i32
    return %c0_i32, %c0_i32_0 : i32, i32
  }
  func.func @transform_5(%arg0: i32) -> (i32, i32) {
    %c0_i32 = arith.constant 0 : i32
    %c0_i32_0 = arith.constant 0 : i32
    %c0_i32_1 = arith.constant 0 : i32
    return %c0_i32, %c0_i32_0 : i32, i32
  }
  func.func @transform_6(%arg0: i32) -> (i32, i32, i32) {
    %c0_i32 = arith.constant 0 : i32
    %c0_i32_0 = arith.constant 0 : i32
    %c0_i32_1 = arith.constant 0 : i32
    return %arg0, %c0_i32, %c0_i32_0 : i32, i32, i32
  }
}

module attributes {stable_mosaic.version = 11 : i64} {
  func.func @five_regressor_kernel(%arg0: i32, %arg1: memref<128x16xf32, #tpu.memory_space<vmem>>, %arg2: memref<16x32xbf16, #tpu.memory_space<vmem>>, %arg3: memref<3x32x32xbf16, #tpu.memory_space<vmem>>, %arg4: memref<4x1x32xf32, #tpu.memory_space<vmem>>, %arg5: memref<1x32xf32, #tpu.memory_space<vmem>>, %arg6: memref<1x1xf32, #tpu.memory_space<smem>>, %arg7: memref<1x1x128xf32, #tpu.memory_space<vmem>>) attributes {dimension_semantics = [#tpu.dimension_semantics<parallel>], iteration_bounds = array<i64: 1>, scalar_prefetch = 0 : i64, scratch_operands = 0 : i64, tpu.core_type = #tpu.core_type<tc>, window_params = [{transform_indices = @transform_0, window_bounds = array<i64: 128, 16>}, {pipeline_mode = #tpu.pipeline_mode<synchronous>, transform_indices = @transform_1, window_bounds = array<i64: 16, 32>}, {pipeline_mode = #tpu.pipeline_mode<synchronous>, transform_indices = @transform_2, window_bounds = array<i64: 3, 32, 32>}, {pipeline_mode = #tpu.pipeline_mode<synchronous>, transform_indices = @transform_3, window_bounds = array<i64: 4, 1, 32>}, {pipeline_mode = #tpu.pipeline_mode<synchronous>, transform_indices = @transform_4, window_bounds = array<i64: 1, 32>}, {transform_indices = @transform_5, window_bounds = array<i64: 1, 1>}, {transform_indices = @transform_6, window_bounds = array<i64: 1, 1, 128>}]} {
    %c0 = arith.constant 0 : index
    %c0_0 = arith.constant 0 : index
    %0 = vector.load %arg1[%c0, %c0_0] : memref<128x16xf32, #tpu.memory_space<vmem>>, vector<128x16xf32>
    %1 = arith.truncf %0 : vector<128x16xf32> to vector<128x16xbf16>
    %c0_1 = arith.constant 0 : index
    %c0_2 = arith.constant 0 : index
    %2 = vector.load %arg2[%c0_1, %c0_2] : memref<16x32xbf16, #tpu.memory_space<vmem>>, vector<16x32xbf16>
    %cst = arith.constant dense<0.000000e+00> : vector<128x32xf32>
    %3 = tpu.matmul %1, %2, %cst {dimension_numbers = #tpu.dot_dimension_numbers<[1], [0], [0], [1], [0, 0, 1, 1], [], []>} : vector<128x16xbf16>, vector<16x32xbf16>, vector<128x32xf32> -> vector<128x32xf32>
    %c0_3 = arith.constant 0 : index
    %c0_4 = arith.constant 0 : index
    %c0_5 = arith.constant 0 : index
    %4 = vector.load %arg4[%c0_3, %c0_4, %c0_5] : memref<4x1x32xf32, #tpu.memory_space<vmem>>, vector<1x1x32xf32>
    %5 = vector.shape_cast %4 : vector<1x1x32xf32> to vector<1x32xf32>
    %6 = vector.broadcast %5 : vector<1x32xf32> to vector<128x32xf32>
    %7 = arith.addf %3, %6 : vector<128x32xf32>
    %cst_6 = arith.constant 0.000000e+00 : f32
    %8 = vector.broadcast %cst_6 : f32 to vector<128x32xf32>
    %9 = arith.maximumf %7, %8 : vector<128x32xf32>
    %10 = arith.truncf %9 : vector<128x32xf32> to vector<128x32xbf16>
    %c0_7 = arith.constant 0 : index
    %c0_8 = arith.constant 0 : index
    %c0_9 = arith.constant 0 : index
    %11 = vector.load %arg3[%c0_7, %c0_8, %c0_9] : memref<3x32x32xbf16, #tpu.memory_space<vmem>>, vector<1x32x32xbf16>
    %12 = vector.shape_cast %11 : vector<1x32x32xbf16> to vector<32x32xbf16>
    %cst_10 = arith.constant dense<0.000000e+00> : vector<128x32xf32>
    %13 = tpu.matmul %10, %12, %cst_10 {dimension_numbers = #tpu.dot_dimension_numbers<[1], [0], [0], [1], [0, 0, 1, 1], [], []>} : vector<128x32xbf16>, vector<32x32xbf16>, vector<128x32xf32> -> vector<128x32xf32>
    %c1 = arith.constant 1 : index
    %c0_11 = arith.constant 0 : index
    %c0_12 = arith.constant 0 : index
    %14 = vector.load %arg4[%c1, %c0_11, %c0_12] : memref<4x1x32xf32, #tpu.memory_space<vmem>>, vector<1x1x32xf32>
    %15 = vector.shape_cast %14 : vector<1x1x32xf32> to vector<1x32xf32>
    %16 = vector.broadcast %15 : vector<1x32xf32> to vector<128x32xf32>
    %17 = arith.addf %13, %16 : vector<128x32xf32>
    %cst_13 = arith.constant 0.000000e+00 : f32
    %18 = vector.broadcast %cst_13 : f32 to vector<128x32xf32>
    %19 = arith.maximumf %17, %18 : vector<128x32xf32>
    %20 = arith.truncf %19 : vector<128x32xf32> to vector<128x32xbf16>
    %c1_14 = arith.constant 1 : index
    %c0_15 = arith.constant 0 : index
    %c0_16 = arith.constant 0 : index
    %21 = vector.load %arg3[%c1_14, %c0_15, %c0_16] : memref<3x32x32xbf16, #tpu.memory_space<vmem>>, vector<1x32x32xbf16>
    %22 = vector.shape_cast %21 : vector<1x32x32xbf16> to vector<32x32xbf16>
    %cst_17 = arith.constant dense<0.000000e+00> : vector<128x32xf32>
    %23 = tpu.matmul %20, %22, %cst_17 {dimension_numbers = #tpu.dot_dimension_numbers<[1], [0], [0], [1], [0, 0, 1, 1], [], []>} : vector<128x32xbf16>, vector<32x32xbf16>, vector<128x32xf32> -> vector<128x32xf32>
    %c2 = arith.constant 2 : index
    %c0_18 = arith.constant 0 : index
    %c0_19 = arith.constant 0 : index
    %24 = vector.load %arg4[%c2, %c0_18, %c0_19] : memref<4x1x32xf32, #tpu.memory_space<vmem>>, vector<1x1x32xf32>
    %25 = vector.shape_cast %24 : vector<1x1x32xf32> to vector<1x32xf32>
    %26 = vector.broadcast %25 : vector<1x32xf32> to vector<128x32xf32>
    %27 = arith.addf %23, %26 : vector<128x32xf32>
    %cst_20 = arith.constant 0.000000e+00 : f32
    %28 = vector.broadcast %cst_20 : f32 to vector<128x32xf32>
    %29 = arith.maximumf %27, %28 : vector<128x32xf32>
    %30 = arith.truncf %29 : vector<128x32xf32> to vector<128x32xbf16>
    %c2_21 = arith.constant 2 : index
    %c0_22 = arith.constant 0 : index
    %c0_23 = arith.constant 0 : index
    %31 = vector.load %arg3[%c2_21, %c0_22, %c0_23] : memref<3x32x32xbf16, #tpu.memory_space<vmem>>, vector<1x32x32xbf16>
    %32 = vector.shape_cast %31 : vector<1x32x32xbf16> to vector<32x32xbf16>
    %cst_24 = arith.constant dense<0.000000e+00> : vector<128x32xf32>
    %33 = tpu.matmul %30, %32, %cst_24 {dimension_numbers = #tpu.dot_dimension_numbers<[1], [0], [0], [1], [0, 0, 1, 1], [], []>} : vector<128x32xbf16>, vector<32x32xbf16>, vector<128x32xf32> -> vector<128x32xf32>
    %c3 = arith.constant 3 : index
    %c0_25 = arith.constant 0 : index
    %c0_26 = arith.constant 0 : index
    %34 = vector.load %arg4[%c3, %c0_25, %c0_26] : memref<4x1x32xf32, #tpu.memory_space<vmem>>, vector<1x1x32xf32>
    %35 = vector.shape_cast %34 : vector<1x1x32xf32> to vector<1x32xf32>
    %36 = vector.broadcast %35 : vector<1x32xf32> to vector<128x32xf32>
    %37 = arith.addf %33, %36 : vector<128x32xf32>
    %cst_27 = arith.constant 0.000000e+00 : f32
    %38 = vector.broadcast %cst_27 : f32 to vector<128x32xf32>
    %39 = arith.maximumf %37, %38 : vector<128x32xf32>
    %c0_28 = arith.constant 0 : index
    %c0_29 = arith.constant 0 : index
    %40 = vector.load %arg5[%c0_28, %c0_29] : memref<1x32xf32, #tpu.memory_space<vmem>>, vector<1x32xf32>
    %41 = vector.broadcast %40 : vector<1x32xf32> to vector<128x32xf32>
    %42 = arith.mulf %39, %41 : vector<128x32xf32>
    %cst_30 = arith.constant dense<0.000000e+00> : vector<128xf32>
    %43 = vector.multi_reduction <add>, %42, %cst_30 [1] : vector<128x32xf32> to vector<128xf32>
    %44 = vector.shape_cast %43 : vector<128xf32> to vector<128x1xf32>
    %c0_31 = arith.constant 0 : index
    %c0_32 = arith.constant 0 : index
    %45 = memref.load %arg6[%c0_31, %c0_32] : memref<1x1xf32, #tpu.memory_space<smem>>
    %46 = vector.broadcast %45 : f32 to vector<128x1xf32>
    %47 = arith.addf %44, %46 : vector<128x1xf32>
    %48 = vector.shape_cast %47 : vector<128x1xf32> to vector<1x128xf32>
    %c0_33 = arith.constant 0 : index
    %c0_34 = arith.constant 0 : index
    %c0_35 = arith.constant 0 : index
    %49 = vector.load %arg7[%c0_33, %c0_34, %c0_35] : memref<1x1x128xf32, #tpu.memory_space<vmem>>, vector<1x1x128xf32>
    %50 = vector.shape_cast %49 : vector<1x1x128xf32> to vector<1x128xf32>
    %51 = vector.shape_cast %48 : vector<1x128xf32> to vector<1x1x128xf32>
    tpu.vector_store %arg7[%c0_33, %c0_34, %c0_35], %51 {strides = array<i32>} : memref<1x1x128xf32, #tpu.memory_space<vmem>>, vector<1x1x128xf32>,
    return
  }
  func.func @transform_0(%arg0: i32) -> (i32, i32) {
    %c0_i32 = arith.constant 0 : i32
    %c0_i32_0 = arith.constant 0 : i32
    return %arg0, %c0_i32 : i32, i32
  }
  func.func @transform_1(%arg0: i32) -> (i32, i32) {
    %c0_i32 = arith.constant 0 : i32
    %c0_i32_0 = arith.constant 0 : i32
    %c0_i32_1 = arith.constant 0 : i32
    return %c0_i32, %c0_i32_0 : i32, i32
  }
  func.func @transform_2(%arg0: i32) -> (i32, i32, i32) {
    %c0_i32 = arith.constant 0 : i32
    %c0_i32_0 = arith.constant 0 : i32
    %c0_i32_1 = arith.constant 0 : i32
    %c0_i32_2 = arith.constant 0 : i32
    return %c0_i32, %c0_i32_0, %c0_i32_1 : i32, i32, i32
  }
  func.func @transform_3(%arg0: i32) -> (i32, i32, i32) {
    %c0_i32 = arith.constant 0 : i32
    %c0_i32_0 = arith.constant 0 : i32
    %c0_i32_1 = arith.constant 0 : i32
    %c0_i32_2 = arith.constant 0 : i32
    return %c0_i32, %c0_i32_0, %c0_i32_1 : i32, i32, i32
  }
  func.func @transform_4(%arg0: i32) -> (i32, i32) {
    %c0_i32 = arith.constant 0 : i32
    %c0_i32_0 = arith.constant 0 : i32
    %c0_i32_1 = arith.constant 0 : i32
    return %c0_i32, %c0_i32_0 : i32, i32
  }
  func.func @transform_5(%arg0: i32) -> (i32, i32) {
    %c0_i32 = arith.constant 0 : i32
    %c0_i32_0 = arith.constant 0 : i32
    %c0_i32_1 = arith.constant 0 : i32
    return %c0_i32, %c0_i32_0 : i32, i32
  }
  func.func @transform_6(%arg0: i32) -> (i32, i32, i32) {
    %c0_i32 = arith.constant 0 : i32
    %c0_i32_0 = arith.constant 0 : i32
    %c0_i32_1 = arith.constant 0 : i32
    return %arg0, %c0_i32, %c0_i32_0 : i32, i32, i32
  }
}

module attributes {stable_mosaic.version = 11 : i64} {
  func.func @five_regressor_kernel(%arg0: i32, %arg1: memref<128x16xf32, #tpu.memory_space<vmem>>, %arg2: memref<16x32xbf16, #tpu.memory_space<vmem>>, %arg3: memref<3x32x32xbf16, #tpu.memory_space<vmem>>, %arg4: memref<4x1x32xf32, #tpu.memory_space<vmem>>, %arg5: memref<1x32xf32, #tpu.memory_space<vmem>>, %arg6: memref<1x1xf32, #tpu.memory_space<smem>>, %arg7: memref<128x1xf32, #tpu.memory_space<vmem>>) attributes {dimension_semantics = [#tpu.dimension_semantics<parallel>], iteration_bounds = array<i64: 1>, scalar_prefetch = 0 : i64, scratch_operands = 0 : i64, tpu.core_type = #tpu.core_type<tc>, window_params = [{transform_indices = @transform_0, window_bounds = array<i64: 128, 16>}, {pipeline_mode = #tpu.pipeline_mode<synchronous>, transform_indices = @transform_1, window_bounds = array<i64: 16, 32>}, {pipeline_mode = #tpu.pipeline_mode<synchronous>, transform_indices = @transform_2, window_bounds = array<i64: 3, 32, 32>}, {pipeline_mode = #tpu.pipeline_mode<synchronous>, transform_indices = @transform_3, window_bounds = array<i64: 4, 1, 32>}, {pipeline_mode = #tpu.pipeline_mode<synchronous>, transform_indices = @transform_4, window_bounds = array<i64: 1, 32>}, {transform_indices = @transform_5, window_bounds = array<i64: 1, 1>}, {transform_indices = @transform_6, window_bounds = array<i64: 128, 1>}]} {
    %c0 = arith.constant 0 : index
    %c0_0 = arith.constant 0 : index
    %0 = vector.load %arg1[%c0, %c0_0] : memref<128x16xf32, #tpu.memory_space<vmem>>, vector<128x16xf32>
    %1 = arith.truncf %0 : vector<128x16xf32> to vector<128x16xbf16>
    %c0_1 = arith.constant 0 : index
    %c0_2 = arith.constant 0 : index
    %2 = vector.load %arg2[%c0_1, %c0_2] : memref<16x32xbf16, #tpu.memory_space<vmem>>, vector<16x32xbf16>
    %cst = arith.constant dense<0.000000e+00> : vector<128x32xf32>
    %3 = tpu.matmul %1, %2, %cst {dimension_numbers = #tpu.dot_dimension_numbers<[1], [0], [0], [1], [0, 0, 1, 1], [], []>} : vector<128x16xbf16>, vector<16x32xbf16>, vector<128x32xf32> -> vector<128x32xf32>
    %c0_3 = arith.constant 0 : index
    %c0_4 = arith.constant 0 : index
    %c0_5 = arith.constant 0 : index
    %4 = vector.load %arg4[%c0_3, %c0_4, %c0_5] : memref<4x1x32xf32, #tpu.memory_space<vmem>>, vector<1x1x32xf32>
    %5 = vector.shape_cast %4 : vector<1x1x32xf32> to vector<1x32xf32>
    %6 = vector.broadcast %5 : vector<1x32xf32> to vector<128x32xf32>
    %7 = arith.addf %3, %6 : vector<128x32xf32>
    %cst_6 = arith.constant 0.000000e+00 : f32
    %8 = vector.broadcast %cst_6 : f32 to vector<128x32xf32>
    %9 = arith.maximumf %7, %8 : vector<128x32xf32>
    %10 = arith.truncf %9 : vector<128x32xf32> to vector<128x32xbf16>
    %c0_7 = arith.constant 0 : index
    %c0_8 = arith.constant 0 : index
    %c0_9 = arith.constant 0 : index
    %11 = vector.load %arg3[%c0_7, %c0_8, %c0_9] : memref<3x32x32xbf16, #tpu.memory_space<vmem>>, vector<1x32x32xbf16>
    %12 = vector.shape_cast %11 : vector<1x32x32xbf16> to vector<32x32xbf16>
    %cst_10 = arith.constant dense<0.000000e+00> : vector<128x32xf32>
    %13 = tpu.matmul %10, %12, %cst_10 {dimension_numbers = #tpu.dot_dimension_numbers<[1], [0], [0], [1], [0, 0, 1, 1], [], []>} : vector<128x32xbf16>, vector<32x32xbf16>, vector<128x32xf32> -> vector<128x32xf32>
    %c1 = arith.constant 1 : index
    %c0_11 = arith.constant 0 : index
    %c0_12 = arith.constant 0 : index
    %14 = vector.load %arg4[%c1, %c0_11, %c0_12] : memref<4x1x32xf32, #tpu.memory_space<vmem>>, vector<1x1x32xf32>
    %15 = vector.shape_cast %14 : vector<1x1x32xf32> to vector<1x32xf32>
    %16 = vector.broadcast %15 : vector<1x32xf32> to vector<128x32xf32>
    %17 = arith.addf %13, %16 : vector<128x32xf32>
    %cst_13 = arith.constant 0.000000e+00 : f32
    %18 = vector.broadcast %cst_13 : f32 to vector<128x32xf32>
    %19 = arith.maximumf %17, %18 : vector<128x32xf32>
    %20 = arith.truncf %19 : vector<128x32xf32> to vector<128x32xbf16>
    %c1_14 = arith.constant 1 : index
    %c0_15 = arith.constant 0 : index
    %c0_16 = arith.constant 0 : index
    %21 = vector.load %arg3[%c1_14, %c0_15, %c0_16] : memref<3x32x32xbf16, #tpu.memory_space<vmem>>, vector<1x32x32xbf16>
    %22 = vector.shape_cast %21 : vector<1x32x32xbf16> to vector<32x32xbf16>
    %cst_17 = arith.constant dense<0.000000e+00> : vector<128x32xf32>
    %23 = tpu.matmul %20, %22, %cst_17 {dimension_numbers = #tpu.dot_dimension_numbers<[1], [0], [0], [1], [0, 0, 1, 1], [], []>} : vector<128x32xbf16>, vector<32x32xbf16>, vector<128x32xf32> -> vector<128x32xf32>
    %c2 = arith.constant 2 : index
    %c0_18 = arith.constant 0 : index
    %c0_19 = arith.constant 0 : index
    %24 = vector.load %arg4[%c2, %c0_18, %c0_19] : memref<4x1x32xf32, #tpu.memory_space<vmem>>, vector<1x1x32xf32>
    %25 = vector.shape_cast %24 : vector<1x1x32xf32> to vector<1x32xf32>
    %26 = vector.broadcast %25 : vector<1x32xf32> to vector<128x32xf32>
    %27 = arith.addf %23, %26 : vector<128x32xf32>
    %cst_20 = arith.constant 0.000000e+00 : f32
    %28 = vector.broadcast %cst_20 : f32 to vector<128x32xf32>
    %29 = arith.maximumf %27, %28 : vector<128x32xf32>
    %30 = arith.truncf %29 : vector<128x32xf32> to vector<128x32xbf16>
    %c2_21 = arith.constant 2 : index
    %c0_22 = arith.constant 0 : index
    %c0_23 = arith.constant 0 : index
    %31 = vector.load %arg3[%c2_21, %c0_22, %c0_23] : memref<3x32x32xbf16, #tpu.memory_space<vmem>>, vector<1x32x32xbf16>
    %32 = vector.shape_cast %31 : vector<1x32x32xbf16> to vector<32x32xbf16>
    %cst_24 = arith.constant dense<0.000000e+00> : vector<128x32xf32>
    %33 = tpu.matmul %30, %32, %cst_24 {dimension_numbers = #tpu.dot_dimension_numbers<[1], [0], [0], [1], [0, 0, 1, 1], [], []>} : vector<128x32xbf16>, vector<32x32xbf16>, vector<128x32xf32> -> vector<128x32xf32>
    %c3 = arith.constant 3 : index
    %c0_25 = arith.constant 0 : index
    %c0_26 = arith.constant 0 : index
    %34 = vector.load %arg4[%c3, %c0_25, %c0_26] : memref<4x1x32xf32, #tpu.memory_space<vmem>>, vector<1x1x32xf32>
    %35 = vector.shape_cast %34 : vector<1x1x32xf32> to vector<1x32xf32>
    %36 = vector.broadcast %35 : vector<1x32xf32> to vector<128x32xf32>
    %37 = arith.addf %33, %36 : vector<128x32xf32>
    %cst_27 = arith.constant 0.000000e+00 : f32
    %38 = vector.broadcast %cst_27 : f32 to vector<128x32xf32>
    %39 = arith.maximumf %37, %38 : vector<128x32xf32>
    %c0_28 = arith.constant 0 : index
    %c0_29 = arith.constant 0 : index
    %40 = vector.load %arg5[%c0_28, %c0_29] : memref<1x32xf32, #tpu.memory_space<vmem>>, vector<1x32xf32>
    %41 = vector.broadcast %40 : vector<1x32xf32> to vector<128x32xf32>
    %42 = arith.mulf %39, %41 : vector<128x32xf32>
    %cst_30 = arith.constant dense<0.000000e+00> : vector<128xf32>
    %43 = vector.multi_reduction <add>, %42, %cst_30 [1] : vector<128x32xf32> to vector<128xf32>
    %44 = vector.shape_cast %43 : vector<128xf32> to vector<128x1xf32>
    %c0_31 = arith.constant 0 : index
    %c0_32 = arith.constant 0 : index
    %45 = memref.load %arg6[%c0_31, %c0_32] : memref<1x1xf32, #tpu.memory_space<smem>>
    %46 = vector.broadcast %45 : f32 to vector<128x1xf32>
    %47 = arith.addf %44, %46 : vector<128x1xf32>
    %c0_33 = arith.constant 0 : index
    %c0_34 = arith.constant 0 : index
    %48 = vector.load %arg7[%c0_33, %c0_34] : memref<128x1xf32, #tpu.memory_space<vmem>>, vector<128x1xf32>
    tpu.vector_store %arg7[%c0_33, %c0_34], %47 {strides = array<i32>} : memref<128x1xf32, #tpu.memory_space<vmem>>, vector<128x1xf32>,
    return
  }
  func.func @transform_0(%arg0: i32) -> (i32, i32) {
    %c0_i32 = arith.constant 0 : i32
    %c0_i32_0 = arith.constant 0 : i32
    return %arg0, %c0_i32 : i32, i32
  }
  func.func @transform_1(%arg0: i32) -> (i32, i32) {
    %c0_i32 = arith.constant 0 : i32
    %c0_i32_0 = arith.constant 0 : i32
    %c0_i32_1 = arith.constant 0 : i32
    return %c0_i32, %c0_i32_0 : i32, i32
  }
  func.func @transform_2(%arg0: i32) -> (i32, i32, i32) {
    %c0_i32 = arith.constant 0 : i32
    %c0_i32_0 = arith.constant 0 : i32
    %c0_i32_1 = arith.constant 0 : i32
    %c0_i32_2 = arith.constant 0 : i32
    return %c0_i32, %c0_i32_0, %c0_i32_1 : i32, i32, i32
  }
  func.func @transform_3(%arg0: i32) -> (i32, i32, i32) {
    %c0_i32 = arith.constant 0 : i32
    %c0_i32_0 = arith.constant 0 : i32
    %c0_i32_1 = arith.constant 0 : i32
    %c0_i32_2 = arith.constant 0 : i32
    return %c0_i32, %c0_i32_0, %c0_i32_1 : i32, i32, i32
  }
  func.func @transform_4(%arg0: i32) -> (i32, i32) {
    %c0_i32 = arith.constant 0 : i32
    %c0_i32_0 = arith.constant 0 : i32
    %c0_i32_1 = arith.constant 0 : i32
    return %c0_i32, %c0_i32_0 : i32, i32
  }
  func.func @transform_5(%arg0: i32) -> (i32, i32) {
    %c0_i32 = arith.constant 0 : i32
    %c0_i32_0 = arith.constant 0 : i32
    %c0_i32_1 = arith.constant 0 : i32
    return %c0_i32, %c0_i32_0 : i32, i32
  }
  func.func @transform_6(%arg0: i32) -> (i32, i32) {
    %c0_i32 = arith.constant 0 : i32
    %c0_i32_0 = arith.constant 0 : i32
    return %arg0, %c0_i32 : i32, i32
  }
}

</mosaic_0001>

<llo_original>
// kernel: tpu_custom_call.1
$region0: #{tpu_custom_call.1}
  #allocation0 [shape = 'u32[]', space=smem, size = 0x4, offset = 0x4, fixed_abs, tag = 'smem constant byte address 0x4 - core index']
  #allocation1 [shape = 'u32[144,128]{1,0:T(1,128)}', space=vmem, size = 0x12000, scoped, tag = 'internal scratch']
  #allocation2 [shape = 'f32[1,1]{1,0:T(1,128)S(6)}', space=smem, size = 0x200, scoped, tag = 'scoped memory for tpu_custom_call.1']
  %s0 = inlined_call_operand.vmem [shape: f32[128,16], index: 0, kind: input, shape index: {}]
  %s1 = inlined_call_operand.vmem [shape: bf16[16,32], index: 1, kind: input, shape index: {}]
  %s2 = inlined_call_operand.vmem [shape: bf16[3,32,32], index: 2, kind: input, shape index: {}]
  %s3 = inlined_call_operand.vmem [shape: f32[4,1,32], index: 3, kind: input, shape index: {}]
  %s4 = inlined_call_operand.vmem [shape: f32[1,32], index: 4, kind: input, shape index: {}]
  %s5 = inlined_call_operand.<no memory space> [shape: f32[1,1], index: 5, kind: input, shape index: {}]
  %s6 = inlined_call_operand.hbm [shape: f32[1,1,128], index: 6, kind: output, shape index: {}]
  %s7 = sld [smem:[#allocation0]]
  $region34: #{tpu_custom_call.1} parent=0
    _
  %s9 = ssub.s32 1, %s7
  %s10 = scalar_select 0, %s9, %s7
  %11 = sst [smem:[#allocation2]] %s5
  $region1: #{tpu_custom_call.1} parent=0
    #allocation3 [shape = 'u8[512]{0}', space=vmem, size = 0x400, scoped, tag = 'output window, operand 0, single buffered']
    #allocation4 [shape = 's32[1]{0}', space=sflag, size = 0x4, scoped, tag = 'scoped memory for tpu_custom_call.1']
    %12 = vsyncpa [#allocation4], 0
    // Predicated region
    $region2: #{tpu_custom_call.1} parent=1 // pred_check
      _
    $region3: #{tpu_custom_call.1} parent=1 // pred_check_branch
      %14 = sbr.rel (0) target = $region5
    $region4: #{tpu_custom_call.1} parent=1 // pred_region
      _
    $region5: #{tpu_custom_call.1} parent=1 // pred_fallthru
      _
    // Predicated region
    $region6: #{tpu_custom_call.1} parent=1 // pred_check
      _
    $region7: #{tpu_custom_call.1} parent=1 // pred_check_branch
      %16 = sbr.rel (0) target = $region9
    $region8: #{tpu_custom_call.1} parent=1 // pred_region
      _
    $region9: #{tpu_custom_call.1} parent=1 // pred_fallthru
      _
    // Predicated region
    $region10: #{tpu_custom_call.1} parent=1 // pred_check
      _
    $region11: #{tpu_custom_call.1} parent=1 // pred_check_branch
      %18 = sbr.rel (0) target = $region13
    $region12: #{tpu_custom_call.1} parent=1 // pred_region
      _
    $region13: #{tpu_custom_call.1} parent=1 // pred_fallthru
      _
    // Predicated region
    $region14: #{tpu_custom_call.1} parent=1 // pred_check
      _
    $region15: #{tpu_custom_call.1} parent=1 // pred_check_branch
      %20 = sbr.rel (0) target = $region17
    $region16: #{tpu_custom_call.1} parent=1 // pred_region
      _
    $region17: #{tpu_custom_call.1} parent=1 // pred_fallthru
      _
    // Predicated region
    $region18: #{tpu_custom_call.1} parent=1 // pred_check
      _
    $region19: #{tpu_custom_call.1} parent=1 // pred_check_branch
      %22 = sbr.rel (0) target = $region21
    $region20: #{tpu_custom_call.1} parent=1 // pred_region
      _
    $region21: #{tpu_custom_call.1} parent=1 // pred_fallthru
      _
    // Predicated region
    $region22: #{tpu_custom_call.1} parent=1 // pred_check
      _
    $region23: #{tpu_custom_call.1} parent=1 // pred_check_branch
      %24 = sbr.rel (0) target = $region25
    $region24: #{tpu_custom_call.1} parent=1 // pred_region
      _
    $region25: #{tpu_custom_call.1} parent=1 // pred_fallthru
      _
    %v26 = vld [vmem:[%s0] sm:$0xff]
    %v27 = vld [vmem:[%s0 + $0x8] sm:$0xff]
    %v28 = vld [vmem:[%s0 + $0x10] sm:$0xff]
    %v29 = vld [vmem:[%s0 + $0x18] sm:$0xff]
    %v30 = vld [vmem:[%s0 + $0x20] sm:$0xff]
    %v31 = vld [vmem:[%s0 + $0x28] sm:$0xff]
    %v32 = vld [vmem:[%s0 + $0x30] sm:$0xff]
    %v33 = vld [vmem:[%s0 + $0x38] sm:$0xff]
    %v34 = vld [vmem:[%s0 + $0x40] sm:$0xff]
    %v35 = vld [vmem:[%s0 + $0x48] sm:$0xff]
    %v36 = vld [vmem:[%s0 + $0x50] sm:$0xff]
    %v37 = vld [vmem:[%s0 + $0x58] sm:$0xff]
    %v38 = vld [vmem:[%s0 + $0x60] sm:$0xff]
    %v39 = vld [vmem:[%s0 + $0x68] sm:$0xff]
    %v40 = vld [vmem:[%s0 + $0x70] sm:$0xff]
    %v41 = vld [vmem:[%s0 + $0x78] sm:$0xff]
    %v42 = vpack.c.bf16 %v27, %v26
    %v43 = vpack.c.bf16 %v29, %v28
    %v44 = vpack.c.bf16 %v31, %v30
    %v45 = vpack.c.bf16 %v33, %v32
    %v46 = vpack.c.bf16 %v35, %v34
    %v47 = vpack.c.bf16 %v37, %v36
    %v48 = vpack.c.bf16 %v39, %v38
    %v49 = vpack.c.bf16 %v41, %v40
    %v50 = vld [vmem:[%s1] sm:$0xf]
    %v51 = vld [vmem:[%s1 + $0x4] sm:$0xf]
    %v52 = vld [vmem:[%s3] sm:$0x1]
    %v54 = vlaneseq
    %v55 = vshrl.u32 %v54, 7
    %v56 = vsub.s32 0, %v55
    %v57 = vrot.slane %v52, %v56
    %v61 = vunpack.c.l.b16 %v50
    %v62 = vunpack.c.l.b16 %v51
    %v63 = vpack.c.b16 %v62, %v61
    %vm65 = vcmask 130048
    %v67 = vsel %vm65, %v42, 0
    %v70 = vsel %vm65, %v43, 0
    %v73 = vsel %vm65, %v44, 0
    %v76 = vsel %vm65, %v45, 0
    %v79 = vsel %vm65, %v46, 0
    %v82 = vsel %vm65, %v47, 0
    %v85 = vsel %vm65, %v48, 0
    %v88 = vsel %vm65, %v49, 0
    %90 = vmatprep.subr.bf16.mxu0 0
    %91 = vmatpush1.bf16.msra.mxu0 %v63
    %92 = vmatprep.subr.bf16.mxu0 0
    %93 = vmatpush1.bf16.msra.mxu0 0
    %94 = vmatprep.subr.bf16.mxu0 0
    %95 = vmatpush1.bf16.msra.mxu0 0
    %96 = vmatprep.subr.bf16.mxu0 0
    %97 = vmatpush1.bf16.msra.mxu0 0
    %98 = vmatprep.subr.bf16.mxu0 0
    %99 = vmatpush1.bf16.msra.mxu0 0
    %100 = vmatprep.subr.bf16.mxu0 0
    %101 = vmatpush1.bf16.msra.mxu0 0
    %102 = vmatprep.subr.bf16.mxu0 0
    %103 = vmatpush1.bf16.msra.mxu0 0
    %104 = vmatprep.subr.bf16.mxu0 0
    %105 = vmatpush1.bf16.msra.mxu0 0
    %106 = vmatprep.subr.bf16.mxu0 0
    %107 = vmatpush1.bf16.msra.mxu0 0
    %108 = vmatprep.subr.bf16.mxu0 0
    %109 = vmatpush1.bf16.msra.mxu0 0
    %110 = vmatprep.subr.bf16.mxu0 0
    %111 = vmatpush1.bf16.msra.mxu0 0
    %112 = vmatprep.subr.bf16.mxu0 0
    %113 = vmatpush1.bf16.msra.mxu0 0
    %114 = vmatprep.subr.bf16.mxu0 0
    %115 = vmatpush1.bf16.msra.mxu0 0
    %116 = vmatprep.subr.bf16.mxu0 0
    %117 = vmatpush1.bf16.msra.mxu0 0
    %118 = vmatprep.subr.bf16.mxu0 0
    %119 = vmatpush1.bf16.msra.mxu0 0
    %120 = vmatprep.subr.bf16.mxu0 0
    %121 = vmatpush1.bf16.msra.mxu0 0
    %122 = vmatprep.mubr.bf16.mxu0 0
    %123 = vmatmul.mubr.bf16.gmra.mrb[0].mxu0 %v67
    %v124 = vpop.f32.mrb[0].mxu0
    %v125 = vadd.f32 %v57, %v124
    %v126 = vpop.f32.mrb[0].mxu0
    %v127 = vpop.f32.mrb[0].mxu0
    %v128 = vadd.f32 %v57, %v127
    %v129 = vpop.f32.mrb[0].mxu0
    %130 = vmatprep.mubr.bf16.mxu0 0
    %131 = vmatmul.mubr.bf16.gmra.mrb[0].mxu0 %v70
    %v132 = vpop.f32.mrb[0].mxu0
    %v133 = vadd.f32 %v57, %v132
    %v134 = vpop.f32.mrb[0].mxu0
    %v135 = vpop.f32.mrb[0].mxu0
    %v136 = vadd.f32 %v57, %v135
    %v137 = vpop.f32.mrb[0].mxu0
    %138 = vmatprep.mubr.bf16.mxu0 0
    %139 = vmatmul.mubr.bf16.gmra.mrb[0].mxu0 %v73
    %v140 = vpop.f32.mrb[0].mxu0
    %v141 = vadd.f32 %v57, %v140
    %v142 = vpop.f32.mrb[0].mxu0
    %v143 = vpop.f32.mrb[0].mxu0
    %v144 = vadd.f32 %v57, %v143
    %v145 = vpop.f32.mrb[0].mxu0
    %146 = vmatprep.mubr.bf16.mxu0 0
    %147 = vmatmul.mubr.bf16.gmra.mrb[0].mxu0 %v76
    %v148 = vpop.f32.mrb[0].mxu0
    %v149 = vadd.f32 %v57, %v148
    %v150 = vpop.f32.mrb[0].mxu0
    %v151 = vpop.f32.mrb[0].mxu0
    %v152 = vadd.f32 %v57, %v151
    %v153 = vpop.f32.mrb[0].mxu0
    %154 = vmatprep.mubr.bf16.mxu0 0
    %155 = vmatmul.mubr.bf16.gmra.mrb[0].mxu0 %v79
    %v156 = vpop.f32.mrb[0].mxu0
    %v157 = vadd.f32 %v57, %v156
    %v158 = vpop.f32.mrb[0].mxu0
    %v159 = vpop.f32.mrb[0].mxu0
    %v160 = vadd.f32 %v57, %v159
    %v161 = vpop.f32.mrb[0].mxu0
    %162 = vmatprep.mubr.bf16.mxu0 0
    %163 = vmatmul.mubr.bf16.gmra.mrb[0].mxu0 %v82
    %v164 = vpop.f32.mrb[0].mxu0
    %v165 = vadd.f32 %v57, %v164
    %v166 = vpop.f32.mrb[0].mxu0
    %v167 = vpop.f32.mrb[0].mxu0
    %v168 = vadd.f32 %v57, %v167
    %v169 = vpop.f32.mrb[0].mxu0
    %170 = vmatprep.mubr.bf16.mxu0 0
    %171 = vmatmul.mubr.bf16.gmra.mrb[0].mxu0 %v85
    %v172 = vpop.f32.mrb[0].mxu0
    %v173 = vadd.f32 %v57, %v172
    %v174 = vpop.f32.mrb[0].mxu0
    %v175 = vpop.f32.mrb[0].mxu0
    %v176 = vadd.f32 %v57, %v175
    %v177 = vpop.f32.mrb[0].mxu0
    %178 = vmatprep.mubr.bf16.mxu0 0
    %179 = vmatmul.mubr.bf16.gmra.mrb[0].mxu0 %v88
    %v180 = vpop.f32.mrb[0].mxu0
    %v181 = vadd.f32 %v57, %v180
    %v182 = vpop.f32.mrb[0].mxu0
    %v183 = vpop.f32.mrb[0].mxu0
    %v184 = vadd.f32 %v57, %v183
    %v185 = vpop.f32.mrb[0].mxu0
    %186 = vdwg.mxu0
    %v187 = vmax.f32 %v125, 0.0
    %v188 = vmax.f32 %v128, 0.0
    %v189 = vmax.f32 %v133, 0.0
    %v190 = vmax.f32 %v136, 0.0
    %v191 = vmax.f32 %v141, 0.0
    %v192 = vmax.f32 %v144, 0.0
    %v193 = vmax.f32 %v149, 0.0
    %v194 = vmax.f32 %v152, 0.0
    %v195 = vmax.f32 %v157, 0.0
    %v196 = vmax.f32 %v160, 0.0
    %v197 = vmax.f32 %v165, 0.0
    %v198 = vmax.f32 %v168, 0.0
    %v199 = vmax.f32 %v173, 0.0
    %v200 = vmax.f32 %v176, 0.0
    %v201 = vmax.f32 %v181, 0.0
    %v202 = vmax.f32 %v184, 0.0
    %v203 = vpack.c.bf16 %v188, %v187
    %v204 = vpack.c.bf16 %v190, %v189
    %v205 = vpack.c.bf16 %v192, %v191
    %v206 = vpack.c.bf16 %v194, %v193
    %v207 = vpack.c.bf16 %v196, %v195
    %v208 = vpack.c.bf16 %v198, %v197
    %v209 = vpack.c.bf16 %v200, %v199
    %v210 = vpack.c.bf16 %v202, %v201
    %v211 = vld [vmem:[%s2] sm:$0xf]
    %v212 = vld [vmem:[%s2 + $0x4] sm:$0xf]
    %v213 = vld [vmem:[%s2 + $0x8] sm:$0xf]
    %v214 = vld [vmem:[%s2 + $0xc] sm:$0xf]
    %s215 = scalar_lea.vmem %s3, 1
    %v216 = vld [vmem:[%s215] sm:$0x1]
    %v218 = vlaneseq
    %v219 = vshrl.u32 %v218, 7
    %v220 = vsub.s32 0, %v219
    %v221 = vrot.slane %v216, %v220
    %v227 = vunpack.c.l.b16 %v211
    %v228 = vunpack.c.l.b16 %v212
    %v229 = vunpack.c.l.b16 %v213
    %v230 = vunpack.c.l.b16 %v214
    %v231 = vpack.c.b16 %v228, %v227
    %v232 = vpack.c.b16 %v230, %v229
    %vm235 = vcmask 261120
    %v237 = vsel %vm235, %v203, 0
    %v240 = vsel %vm235, %v204, 0
    %v243 = vsel %vm235, %v205, 0
    %v246 = vsel %vm235, %v206, 0
    %v249 = vsel %vm235, %v207, 0
    %v252 = vsel %vm235, %v208, 0
    %v255 = vsel %vm235, %v209, 0
    %v258 = vsel %vm235, %v210, 0
    %260 = vmatprep.subr.bf16.mxu0 0
    %261 = vmatpush1.bf16.msra.mxu0 %v231
    %262 = vmatprep.subr.bf16.mxu0 0
    %263 = vmatpush1.bf16.msra.mxu0 %v232
    %264 = vmatprep.subr.bf16.mxu0 0
    %265 = vmatpush1.bf16.msra.mxu0 0
    %266 = vmatprep.subr.bf16.mxu0 0
    %267 = vmatpush1.bf16.msra.mxu0 0
    %268 = vmatprep.subr.bf16.mxu0 0
    %269 = vmatpush1.bf16.msra.mxu0 0
    %270 = vmatprep.subr.bf16.mxu0 0
    %271 = vmatpush1.bf16.msra.mxu0 0
    %272 = vmatprep.subr.bf16.mxu0 0
    %273 = vmatpush1.bf16.msra.mxu0 0
    %274 = vmatprep.subr.bf16.mxu0 0
    %275 = vmatpush1.bf16.msra.mxu0 0
    %276 = vmatprep.subr.bf16.mxu0 0
    %277 = vmatpush1.bf16.msra.mxu0 0
    %278 = vmatprep.subr.bf16.mxu0 0
    %279 = vmatpush1.bf16.msra.mxu0 0
    %280 = vmatprep.subr.bf16.mxu0 0
    %281 = vmatpush1.bf16.msra.mxu0 0
    %282 = vmatprep.subr.bf16.mxu0 0
    %283 = vmatpush1.bf16.msra.mxu0 0
    %284 = vmatprep.subr.bf16.mxu0 0
    %285 = vmatpush1.bf16.msra.mxu0 0
    %286 = vmatprep.subr.bf16.mxu0 0
    %287 = vmatpush1.bf16.msra.mxu0 0
    %288 = vmatprep.subr.bf16.mxu0 0
    %289 = vmatpush1.bf16.msra.mxu0 0
    %290 = vmatprep.subr.bf16.mxu0 0
    %291 = vmatpush1.bf16.msra.mxu0 0
    %292 = vmatprep.mubr.bf16.mxu0 0
    %293 = vmatmul.mubr.bf16.gmra.mrb[0].mxu0 %v237
    %v294 = vpop.f32.mrb[0].mxu0
    %v295 = vadd.f32 %v221, %v294
    %v296 = vpop.f32.mrb[0].mxu0
    %v297 = vpop.f32.mrb[0].mxu0
    %v298 = vadd.f32 %v221, %v297
    %v299 = vpop.f32.mrb[0].mxu0
    %300 = vmatprep.mubr.bf16.mxu0 0
    %301 = vmatmul.mubr.bf16.gmra.mrb[0].mxu0 %v240
    %v302 = vpop.f32.mrb[0].mxu0
    %v303 = vadd.f32 %v221, %v302
    %v304 = vpop.f32.mrb[0].mxu0
    %v305 = vpop.f32.mrb[0].mxu0
    %v306 = vadd.f32 %v221, %v305
    %v307 = vpop.f32.mrb[0].mxu0
    %308 = vmatprep.mubr.bf16.mxu0 0
    %309 = vmatmul.mubr.bf16.gmra.mrb[0].mxu0 %v243
    %v310 = vpop.f32.mrb[0].mxu0
    %v311 = vadd.f32 %v221, %v310
    %v312 = vpop.f32.mrb[0].mxu0
    %v313 = vpop.f32.mrb[0].mxu0
    %v314 = vadd.f32 %v221, %v313
    %v315 = vpop.f32.mrb[0].mxu0
    %316 = vmatprep.mubr.bf16.mxu0 0
    %317 = vmatmul.mubr.bf16.gmra.mrb[0].mxu0 %v246
    %v318 = vpop.f32.mrb[0].mxu0
    %v319 = vadd.f32 %v221, %v318
    %v320 = vpop.f32.mrb[0].mxu0
    %v321 = vpop.f32.mrb[0].mxu0
    %v322 = vadd.f32 %v221, %v321
    %v323 = vpop.f32.mrb[0].mxu0
    %324 = vmatprep.mubr.bf16.mxu0 0
    %325 = vmatmul.mubr.bf16.gmra.mrb[0].mxu0 %v249
    %v326 = vpop.f32.mrb[0].mxu0
    %v327 = vadd.f32 %v221, %v326
    %v328 = vpop.f32.mrb[0].mxu0
    %v329 = vpop.f32.mrb[0].mxu0
    %v330 = vadd.f32 %v221, %v329
    %v331 = vpop.f32.mrb[0].mxu0
    %332 = vmatprep.mubr.bf16.mxu0 0
    %333 = vmatmul.mubr.bf16.gmra.mrb[0].mxu0 %v252
    %v334 = vpop.f32.mrb[0].mxu0
    %v335 = vadd.f32 %v221, %v334
    %v336 = vpop.f32.mrb[0].mxu0
    %v337 = vpop.f32.mrb[0].mxu0
    %v338 = vadd.f32 %v221, %v337
    %v339 = vpop.f32.mrb[0].mxu0
    %340 = vmatprep.mubr.bf16.mxu0 0
    %341 = vmatmul.mubr.bf16.gmra.mrb[0].mxu0 %v255
    %v342 = vpop.f32.mrb[0].mxu0
    %v343 = vadd.f32 %v221, %v342
    %v344 = vpop.f32.mrb[0].mxu0
    %v345 = vpop.f32.mrb[0].mxu0
    %v346 = vadd.f32 %v221, %v345
    %v347 = vpop.f32.mrb[0].mxu0
    %348 = vmatprep.mubr.bf16.mxu0 0
    %349 = vmatmul.mubr.bf16.gmra.mrb[0].mxu0 %v258
    %v350 = vpop.f32.mrb[0].mxu0
    %v351 = vadd.f32 %v221, %v350
    %v352 = vpop.f32.mrb[0].mxu0
    %v353 = vpop.f32.mrb[0].mxu0
    %v354 = vadd.f32 %v221, %v353
    %v355 = vpop.f32.mrb[0].mxu0
    %356 = vdwg.mxu0
    %v357 = vmax.f32 %v295, 0.0
    %v358 = vmax.f32 %v298, 0.0
    %v359 = vmax.f32 %v303, 0.0
    %v360 = vmax.f32 %v306, 0.0
    %v361 = vmax.f32 %v311, 0.0
    %v362 = vmax.f32 %v314, 0.0
    %v363 = vmax.f32 %v319, 0.0
    %v364 = vmax.f32 %v322, 0.0
    %v365 = vmax.f32 %v327, 0.0
    %v366 = vmax.f32 %v330, 0.0
    %v367 = vmax.f32 %v335, 0.0
    %v368 = vmax.f32 %v338, 0.0
    %v369 = vmax.f32 %v343, 0.0
    %v370 = vmax.f32 %v346, 0.0
    %v371 = vmax.f32 %v351, 0.0
    %v372 = vmax.f32 %v354, 0.0
    %v373 = vpack.c.bf16 %v358, %v357
    %v374 = vpack.c.bf16 %v360, %v359
    %v375 = vpack.c.bf16 %v362, %v361
    %v376 = vpack.c.bf16 %v364, %v363
    %v377 = vpack.c.bf16 %v366, %v365
    %v378 = vpack.c.bf16 %v368, %v367
    %v379 = vpack.c.bf16 %v370, %v369
    %v380 = vpack.c.bf16 %v372, %v371
    %s381 = scalar_lea.vmem %s2, 16
    %v382 = vld [vmem:[%s381] sm:$0xf]
    %v383 = vld [vmem:[%s381 + $0x4] sm:$0xf]
    %v384 = vld [vmem:[%s381 + $0x8] sm:$0xf]
    %v385 = vld [vmem:[%s381 + $0xc] sm:$0xf]
    %s386 = scalar_lea.vmem %s3, 2
    %v387 = vld [vmem:[%s386] sm:$0x1]
    %v389 = vlaneseq
    %v390 = vshrl.u32 %v389, 7
    %v391 = vsub.s32 0, %v390
    %v392 = vrot.slane %v387, %v391
    %v398 = vunpack.c.l.b16 %v382
    %v399 = vunpack.c.l.b16 %v383
    %v400 = vunpack.c.l.b16 %v384
    %v401 = vunpack.c.l.b16 %v385
    %v402 = vpack.c.b16 %v399, %v398
    %v403 = vpack.c.b16 %v401, %v400
    %v407 = vsel %vm235, %v373, 0
    %v410 = vsel %vm235, %v374, 0
    %v413 = vsel %vm235, %v375, 0
    %v416 = vsel %vm235, %v376, 0
    %v419 = vsel %vm235, %v377, 0
    %v422 = vsel %vm235, %v378, 0
    %v425 = vsel %vm235, %v379, 0
    %v428 = vsel %vm235, %v380, 0
    %430 = vmatprep.subr.bf16.mxu0 0
    %431 = vmatpush1.bf16.msra.mxu0 %v402
    %432 = vmatprep.subr.bf16.mxu0 0
    %433 = vmatpush1.bf16.msra.mxu0 %v403
    %434 = vmatprep.subr.bf16.mxu0 0
    %435 = vmatpush1.bf16.msra.mxu0 0
    %436 = vmatprep.subr.bf16.mxu0 0
    %437 = vmatpush1.bf16.msra.mxu0 0
    %438 = vmatprep.subr.bf16.mxu0 0
    %439 = vmatpush1.bf16.msra.mxu0 0
    %440 = vmatprep.subr.bf16.mxu0 0
    %441 = vmatpush1.bf16.msra.mxu0 0
    %442 = vmatprep.subr.bf16.mxu0 0
    %443 = vmatpush1.bf16.msra.mxu0 0
    %444 = vmatprep.subr.bf16.mxu0 0
    %445 = vmatpush1.bf16.msra.mxu0 0
    %446 = vmatprep.subr.bf16.mxu0 0
    %447 = vmatpush1.bf16.msra.mxu0 0
    %448 = vmatprep.subr.bf16.mxu0 0
    %449 = vmatpush1.bf16.msra.mxu0 0
    %450 = vmatprep.subr.bf16.mxu0 0
    %451 = vmatpush1.bf16.msra.mxu0 0
    %452 = vmatprep.subr.bf16.mxu0 0
    %453 = vmatpush1.bf16.msra.mxu0 0
    %454 = vmatprep.subr.bf16.mxu0 0
    %455 = vmatpush1.bf16.msra.mxu0 0
    %456 = vmatprep.subr.bf16.mxu0 0
    %457 = vmatpush1.bf16.msra.mxu0 0
    %458 = vmatprep.subr.bf16.mxu0 0
    %459 = vmatpush1.bf16.msra.mxu0 0
    %460 = vmatprep.subr.bf16.mxu0 0
    %461 = vmatpush1.bf16.msra.mxu0 0
    %462 = vmatprep.mubr.bf16.mxu0 0
    %463 = vmatmul.mubr.bf16.gmra.mrb[0].mxu0 %v407
    %v464 = vpop.f32.mrb[0].mxu0
    %v465 = vadd.f32 %v392, %v464
    %v466 = vpop.f32.mrb[0].mxu0
    %v467 = vpop.f32.mrb[0].mxu0
    %v468 = vadd.f32 %v392, %v467
    %v469 = vpop.f32.mrb[0].mxu0
    %470 = vmatprep.mubr.bf16.mxu0 0
    %471 = vmatmul.mubr.bf16.gmra.mrb[0].mxu0 %v410
    %v472 = vpop.f32.mrb[0].mxu0
    %v473 = vadd.f32 %v392, %v472
    %v474 = vpop.f32.mrb[0].mxu0
    %v475 = vpop.f32.mrb[0].mxu0
    %v476 = vadd.f32 %v392, %v475
    %v477 = vpop.f32.mrb[0].mxu0
    %478 = vmatprep.mubr.bf16.mxu0 0
    %479 = vmatmul.mubr.bf16.gmra.mrb[0].mxu0 %v413
    %v480 = vpop.f32.mrb[0].mxu0
    %v481 = vadd.f32 %v392, %v480
    %v482 = vpop.f32.mrb[0].mxu0
    %v483 = vpop.f32.mrb[0].mxu0
    %v484 = vadd.f32 %v392, %v483
    %v485 = vpop.f32.mrb[0].mxu0
    %486 = vmatprep.mubr.bf16.mxu0 0
    %487 = vmatmul.mubr.bf16.gmra.mrb[0].mxu0 %v416
    %v488 = vpop.f32.mrb[0].mxu0
    %v489 = vadd.f32 %v392, %v488
    %v490 = vpop.f32.mrb[0].mxu0
    %v491 = vpop.f32.mrb[0].mxu0
    %v492 = vadd.f32 %v392, %v491
    %v493 = vpop.f32.mrb[0].mxu0
    %494 = vmatprep.mubr.bf16.mxu0 0
    %495 = vmatmul.mubr.bf16.gmra.mrb[0].mxu0 %v419
    %v496 = vpop.f32.mrb[0].mxu0
    %v497 = vadd.f32 %v392, %v496
    %v498 = vpop.f32.mrb[0].mxu0
    %v499 = vpop.f32.mrb[0].mxu0
    %v500 = vadd.f32 %v392, %v499
    %v501 = vpop.f32.mrb[0].mxu0
    %502 = vmatprep.mubr.bf16.mxu0 0
    %503 = vmatmul.mubr.bf16.gmra.mrb[0].mxu0 %v422
    %v504 = vpop.f32.mrb[0].mxu0
    %v505 = vadd.f32 %v392, %v504
    %v506 = vpop.f32.mrb[0].mxu0
    %v507 = vpop.f32.mrb[0].mxu0
    %v508 = vadd.f32 %v392, %v507
    %v509 = vpop.f32.mrb[0].mxu0
    %510 = vmatprep.mubr.bf16.mxu0 0
    %511 = vmatmul.mubr.bf16.gmra.mrb[0].mxu0 %v425
    %v512 = vpop.f32.mrb[0].mxu0
    %v513 = vadd.f32 %v392, %v512
    %v514 = vpop.f32.mrb[0].mxu0
    %v515 = vpop.f32.mrb[0].mxu0
    %v516 = vadd.f32 %v392, %v515
    %v517 = vpop.f32.mrb[0].mxu0
    %518 = vmatprep.mubr.bf16.mxu0 0
    %519 = vmatmul.mubr.bf16.gmra.mrb[0].mxu0 %v428
    %v520 = vpop.f32.mrb[0].mxu0
    %v521 = vadd.f32 %v392, %v520
    %v522 = vpop.f32.mrb[0].mxu0
    %v523 = vpop.f32.mrb[0].mxu0
    %v524 = vadd.f32 %v392, %v523
    %v525 = vpop.f32.mrb[0].mxu0
    %526 = vdwg.mxu0
    %v527 = vmax.f32 %v465, 0.0
    %v528 = vmax.f32 %v468, 0.0
    %v529 = vmax.f32 %v473, 0.0
    %v530 = vmax.f32 %v476, 0.0
    %v531 = vmax.f32 %v481, 0.0
    %v532 = vmax.f32 %v484, 0.0
    %v533 = vmax.f32 %v489, 0.0
    %v534 = vmax.f32 %v492, 0.0
    %v535 = vmax.f32 %v497, 0.0
    %v536 = vmax.f32 %v500, 0.0
    %v537 = vmax.f32 %v505, 0.0
    %v538 = vmax.f32 %v508, 0.0
    %v539 = vmax.f32 %v513, 0.0
    %v540 = vmax.f32 %v516, 0.0
    %v541 = vmax.f32 %v521, 0.0
    %v542 = vmax.f32 %v524, 0.0
    %v543 = vpack.c.bf16 %v528, %v527
    %v544 = vpack.c.bf16 %v530, %v529
    %v545 = vpack.c.bf16 %v532, %v531
    %v546 = vpack.c.bf16 %v534, %v533
    %v547 = vpack.c.bf16 %v536, %v535
    %v548 = vpack.c.bf16 %v538, %v537
    %v549 = vpack.c.bf16 %v540, %v539
    %v550 = vpack.c.bf16 %v542, %v541
    %s551 = scalar_lea.vmem %s2, 32
    %v552 = vld [vmem:[%s551] sm:$0xf]
    %v553 = vld [vmem:[%s551 + $0x4] sm:$0xf]
    %v554 = vld [vmem:[%s551 + $0x8] sm:$0xf]
    %v555 = vld [vmem:[%s551 + $0xc] sm:$0xf]
    %s556 = scalar_lea.vmem %s3, 3
    %v557 = vld [vmem:[%s556] sm:$0x1]
    %v559 = vlaneseq
    %v560 = vshrl.u32 %v559, 7
    %v561 = vsub.s32 0, %v560
    %v562 = vrot.slane %v557, %v561
    %v568 = vunpack.c.l.b16 %v552
    %v569 = vunpack.c.l.b16 %v553
    %v570 = vunpack.c.l.b16 %v554
    %v571 = vunpack.c.l.b16 %v555
    %v572 = vpack.c.b16 %v569, %v568
    %v573 = vpack.c.b16 %v571, %v570
    %v577 = vsel %vm235, %v543, 0
    %v580 = vsel %vm235, %v544, 0
    %v583 = vsel %vm235, %v545, 0
    %v586 = vsel %vm235, %v546, 0
    %v589 = vsel %vm235, %v547, 0
    %v592 = vsel %vm235, %v548, 0
    %v595 = vsel %vm235, %v549, 0
    %v598 = vsel %vm235, %v550, 0
    %600 = vmatprep.subr.bf16.mxu0 0
    %601 = vmatpush1.bf16.msra.mxu0 %v572
    %602 = vmatprep.subr.bf16.mxu0 0
    %603 = vmatpush1.bf16.msra.mxu0 %v573
    %604 = vmatprep.subr.bf16.mxu0 0
    %605 = vmatpush1.bf16.msra.mxu0 0
    %606 = vmatprep.subr.bf16.mxu0 0
    %607 = vmatpush1.bf16.msra.mxu0 0
    %608 = vmatprep.subr.bf16.mxu0 0
    %609 = vmatpush1.bf16.msra.mxu0 0
    %610 = vmatprep.subr.bf16.mxu0 0
    %611 = vmatpush1.bf16.msra.mxu0 0
    %612 = vmatprep.subr.bf16.mxu0 0
    %613 = vmatpush1.bf16.msra.mxu0 0
    %614 = vmatprep.subr.bf16.mxu0 0
    %615 = vmatpush1.bf16.msra.mxu0 0
    %616 = vmatprep.subr.bf16.mxu0 0
    %617 = vmatpush1.bf16.msra.mxu0 0
    %618 = vmatprep.subr.bf16.mxu0 0
    %619 = vmatpush1.bf16.msra.mxu0 0
    %620 = vmatprep.subr.bf16.mxu0 0
    %621 = vmatpush1.bf16.msra.mxu0 0
    %622 = vmatprep.subr.bf16.mxu0 0
    %623 = vmatpush1.bf16.msra.mxu0 0
    %624 = vmatprep.subr.bf16.mxu0 0
    %625 = vmatpush1.bf16.msra.mxu0 0
    %626 = vmatprep.subr.bf16.mxu0 0
    %627 = vmatpush1.bf16.msra.mxu0 0
    %628 = vmatprep.subr.bf16.mxu0 0
    %629 = vmatpush1.bf16.msra.mxu0 0
    %630 = vmatprep.subr.bf16.mxu0 0
    %631 = vmatpush1.bf16.msra.mxu0 0
    %632 = vmatprep.mubr.bf16.mxu0 0
    %633 = vmatmul.mubr.bf16.gmra.mrb[0].mxu0 %v577
    %v634 = vpop.f32.mrb[0].mxu0
    %v635 = vadd.f32 %v562, %v634
    %v636 = vpop.f32.mrb[0].mxu0
    %v637 = vpop.f32.mrb[0].mxu0
    %v638 = vadd.f32 %v562, %v637
    %v639 = vpop.f32.mrb[0].mxu0
    %640 = vmatprep.mubr.bf16.mxu0 0
    %641 = vmatmul.mubr.bf16.gmra.mrb[0].mxu0 %v580
    %v642 = vpop.f32.mrb[0].mxu0
    %v643 = vadd.f32 %v562, %v642
    %v644 = vpop.f32.mrb[0].mxu0
    %v645 = vpop.f32.mrb[0].mxu0
    %v646 = vadd.f32 %v562, %v645
    %v647 = vpop.f32.mrb[0].mxu0
    %648 = vmatprep.mubr.bf16.mxu0 0
    %649 = vmatmul.mubr.bf16.gmra.mrb[0].mxu0 %v583
    %v650 = vpop.f32.mrb[0].mxu0
    %v651 = vadd.f32 %v562, %v650
    %v652 = vpop.f32.mrb[0].mxu0
    %v653 = vpop.f32.mrb[0].mxu0
    %v654 = vadd.f32 %v562, %v653
    %v655 = vpop.f32.mrb[0].mxu0
    %656 = vmatprep.mubr.bf16.mxu0 0
    %657 = vmatmul.mubr.bf16.gmra.mrb[0].mxu0 %v586
    %v658 = vpop.f32.mrb[0].mxu0
    %v659 = vadd.f32 %v562, %v658
    %v660 = vpop.f32.mrb[0].mxu0
    %v661 = vpop.f32.mrb[0].mxu0
    %v662 = vadd.f32 %v562, %v661
    %v663 = vpop.f32.mrb[0].mxu0
    %664 = vmatprep.mubr.bf16.mxu0 0
    %665 = vmatmul.mubr.bf16.gmra.mrb[0].mxu0 %v589
    %v666 = vpop.f32.mrb[0].mxu0
    %v667 = vadd.f32 %v562, %v666
    %v668 = vpop.f32.mrb[0].mxu0
    %v669 = vpop.f32.mrb[0].mxu0
    %v670 = vadd.f32 %v562, %v669
    %v671 = vpop.f32.mrb[0].mxu0
    %672 = vmatprep.mubr.bf16.mxu0 0
    %673 = vmatmul.mubr.bf16.gmra.mrb[0].mxu0 %v592
    %v674 = vpop.f32.mrb[0].mxu0
    %v675 = vadd.f32 %v562, %v674
    %v676 = vpop.f32.mrb[0].mxu0
    %v677 = vpop.f32.mrb[0].mxu0
    %v678 = vadd.f32 %v562, %v677
    %v679 = vpop.f32.mrb[0].mxu0
    %680 = vmatprep.mubr.bf16.mxu0 0
    %681 = vmatmul.mubr.bf16.gmra.mrb[0].mxu0 %v595
    %v682 = vpop.f32.mrb[0].mxu0
    %v683 = vadd.f32 %v562, %v682
    %v684 = vpop.f32.mrb[0].mxu0
    %v685 = vpop.f32.mrb[0].mxu0
    %v686 = vadd.f32 %v562, %v685
    %v687 = vpop.f32.mrb[0].mxu0
    %688 = vmatprep.mubr.bf16.mxu0 0
    %689 = vmatmul.mubr.bf16.gmra.mrb[0].mxu0 %v598
    %v690 = vpop.f32.mrb[0].mxu0
    %v691 = vadd.f32 %v562, %v690
    %v692 = vpop.f32.mrb[0].mxu0
    %v693 = vpop.f32.mrb[0].mxu0
    %v694 = vadd.f32 %v562, %v693
    %v695 = vpop.f32.mrb[0].mxu0
    %696 = vdwg.mxu0
    %v697 = vmax.f32 %v635, 0.0
    %v698 = vmax.f32 %v638, 0.0
    %v699 = vmax.f32 %v643, 0.0
    %v700 = vmax.f32 %v646, 0.0
    %v701 = vmax.f32 %v651, 0.0
    %v702 = vmax.f32 %v654, 0.0
    %v703 = vmax.f32 %v659, 0.0
    %v704 = vmax.f32 %v662, 0.0
    %v705 = vmax.f32 %v667, 0.0
    %v706 = vmax.f32 %v670, 0.0
    %v707 = vmax.f32 %v675, 0.0
    %v708 = vmax.f32 %v678, 0.0
    %v709 = vmax.f32 %v683, 0.0
    %v710 = vmax.f32 %v686, 0.0
    %v711 = vmax.f32 %v691, 0.0
    %v712 = vmax.f32 %v694, 0.0
    %v713 = vld [vmem:[%s4] sm:$0x1]
    %v715 = vlaneseq
    %v716 = vshrl.u32 %v715, 7
    %v717 = vsub.s32 0, %v716
    %v718 = vrot.slane %v713, %v717
    %v720 = vmul.f32 %v697, %v718
    %v721 = vmul.f32 %v698, %v718
    %v722 = vmul.f32 %v699, %v718
    %v723 = vmul.f32 %v700, %v718
    %v724 = vmul.f32 %v701, %v718
    %v725 = vmul.f32 %v702, %v718
    %v726 = vmul.f32 %v703, %v718
    %v727 = vmul.f32 %v704, %v718
    %v728 = vmul.f32 %v705, %v718
    %v729 = vmul.f32 %v706, %v718
    %v730 = vmul.f32 %v707, %v718
    %v731 = vmul.f32 %v708, %v718
    %v732 = vmul.f32 %v709, %v718
    %v733 = vmul.f32 %v710, %v718
    %v734 = vmul.f32 %v711, %v718
    %v735 = vmul.f32 %v712, %v718
    %v736 = vsel %vm235, %v720, 0.0
    %737 = vadd.xlane.f32.xlu0 %v736
    %v738 = vpop.xlane.xlu0 %737
    %v739 = vsel %vm235, %v721, 0.0
    %740 = vadd.xlane.f32.xlu0 %v739
    %v741 = vpop.xlane.xlu0 %740
    %v742 = vsel %vm235, %v722, 0.0
    %743 = vadd.xlane.f32.xlu0 %v742
    %v744 = vpop.xlane.xlu0 %743
    %v745 = vsel %vm235, %v723, 0.0
    %746 = vadd.xlane.f32.xlu0 %v745
    %v747 = vpop.xlane.xlu0 %746
    %v748 = vsel %vm235, %v724, 0.0
    %749 = vadd.xlane.f32.xlu0 %v748
    %v750 = vpop.xlane.xlu0 %749
    %v751 = vsel %vm235, %v725, 0.0
    %752 = vadd.xlane.f32.xlu0 %v751
    %v753 = vpop.xlane.xlu0 %752
    %v754 = vsel %vm235, %v726, 0.0
    %755 = vadd.xlane.f32.xlu0 %v754
    %v756 = vpop.xlane.xlu0 %755
    %v757 = vsel %vm235, %v727, 0.0
    %758 = vadd.xlane.f32.xlu0 %v757
    %v759 = vpop.xlane.xlu0 %758
    %v760 = vsel %vm235, %v728, 0.0
    %761 = vadd.xlane.f32.xlu0 %v760
    %v762 = vpop.xlane.xlu0 %761
    %v763 = vsel %vm235, %v729, 0.0
    %764 = vadd.xlane.f32.xlu0 %v763
    %v765 = vpop.xlane.xlu0 %764
    %v766 = vsel %vm235, %v730, 0.0
    %767 = vadd.xlane.f32.xlu0 %v766
    %v768 = vpop.xlane.xlu0 %767
    %v769 = vsel %vm235, %v731, 0.0
    %770 = vadd.xlane.f32.xlu0 %v769
    %v771 = vpop.xlane.xlu0 %770
    %v772 = vsel %vm235, %v732, 0.0
    %773 = vadd.xlane.f32.xlu0 %v772
    %v774 = vpop.xlane.xlu0 %773
    %v775 = vsel %vm235, %v733, 0.0
    %776 = vadd.xlane.f32.xlu0 %v775
    %v777 = vpop.xlane.xlu0 %776
    %v778 = vsel %vm235, %v734, 0.0
    %779 = vadd.xlane.f32.xlu0 %v778
    %v780 = vpop.xlane.xlu0 %779
    %v781 = vsel %vm235, %v735, 0.0
    %782 = vadd.xlane.f32.xlu0 %v781
    %v783 = vpop.xlane.xlu0 %782
    %s784 = sld [smem:[#allocation2]]
    %v785 = vstv %s784
    %v786 = vadd.f32 %v738, %v785
    %v787 = vadd.f32 %v741, %v785
    %v788 = vadd.f32 %v744, %v785
    %v789 = vadd.f32 %v747, %v785
    %v790 = vadd.f32 %v750, %v785
    %v791 = vadd.f32 %v753, %v785
    %v792 = vadd.f32 %v756, %v785
    %v793 = vadd.f32 %v759, %v785
    %v794 = vadd.f32 %v762, %v785
    %v795 = vadd.f32 %v765, %v785
    %v796 = vadd.f32 %v768, %v785
    %v797 = vadd.f32 %v771, %v785
    %v798 = vadd.f32 %v774, %v785
    %v799 = vadd.f32 %v777, %v785
    %v800 = vadd.f32 %v780, %v785
    %v801 = vadd.f32 %v783, %v785
    %v818 = vlaneseq
    %v819 = vand.u32 %v818, 127
    %v820 = vlaneseq
    %v821 = vshrl.u32 %v820, 7
    %v822 = vsub.s32 %v819, %v821
    %v823 = vrot.slane %v786, %v822
    %v824 = vadd.s32 %v819, 4294967288
    %v825 = vlaneseq
    %v826 = vshrl.u32 %v825, 7
    %v827 = vsub.s32 %v824, %v826
    %v828 = vrot.slane %v787, %v827
    %vm829 = vcmask 130112
    %v830 = vsel %vm829, %v828, %v823
    %v831 = vadd.s32 %v819, 4294967280
    %v832 = vlaneseq
    %v833 = vshrl.u32 %v832, 7
    %v834 = vsub.s32 %v831, %v833
    %v835 = vrot.slane %v788, %v834
    %vm836 = vcmask 195712
    %v837 = vsel %vm836, %v835, %v830
    %v838 = vadd.s32 %v819, 4294967272
    %v839 = vlaneseq
    %v840 = vshrl.u32 %v839, 7
    %v841 = vsub.s32 %v838, %v840
    %v842 = vrot.slane %v789, %v841
    %vm843 = vcmask 261312
    %v844 = vsel %vm843, %v842, %v837
    %v845 = vadd.s32 %v819, 4294967264
    %v846 = vlaneseq
    %v847 = vshrl.u32 %v846, 7
    %v848 = vsub.s32 %v845, %v847
    %v849 = vrot.slane %v790, %v848
    %vm850 = vcmask 326912
    %v851 = vsel %vm850, %v849, %v844
    %v852 = vadd.s32 %v819, 4294967256
    %v853 = vlaneseq
    %v854 = vshrl.u32 %v853, 7
    %v855 = vsub.s32 %v852, %v854
    %v856 = vrot.slane %v791, %v855
    %vm857 = vcmask 392512
    %v858 = vsel %vm857, %v856, %v851
    %v859 = vadd.s32 %v819, 4294967248
    %v860 = vlaneseq
    %v861 = vshrl.u32 %v860, 7
    %v862 = vsub.s32 %v859, %v861
    %v863 = vrot.slane %v792, %v862
    %vm864 = vcmask 458112
    %v865 = vsel %vm864, %v863, %v858
    %v866 = vadd.s32 %v819, 4294967240
    %v867 = vlaneseq
    %v868 = vshrl.u32 %v867, 7
    %v869 = vsub.s32 %v866, %v868
    %v870 = vrot.slane %v793, %v869
    %vm871 = vcmask 523712
    %v872 = vsel %vm871, %v870, %v865
    %v873 = vadd.s32 %v819, 4294967232
    %v874 = vlaneseq
    %v875 = vshrl.u32 %v874, 7
    %v876 = vsub.s32 %v873, %v875
    %v877 = vrot.slane %v794, %v876
    %vm878 = vcmask 589312
    %v879 = vsel %vm878, %v877, %v872
    %v880 = vadd.s32 %v819, 4294967224
    %v881 = vlaneseq
    %v882 = vshrl.u32 %v881, 7
    %v883 = vsub.s32 %v880, %v882
    %v884 = vrot.slane %v795, %v883
    %vm885 = vcmask 654912
    %v886 = vsel %vm885, %v884, %v879
    %v887 = vadd.s32 %v819, 4294967216
    %v888 = vlaneseq
    %v889 = vshrl.u32 %v888, 7
    %v890 = vsub.s32 %v887, %v889
    %v891 = vrot.slane %v796, %v890
    %vm892 = vcmask 720512
    %v893 = vsel %vm892, %v891, %v886
    %v894 = vadd.s32 %v819, 4294967208
    %v895 = vlaneseq
    %v896 = vshrl.u32 %v895, 7
    %v897 = vsub.s32 %v894, %v896
    %v898 = vrot.slane %v797, %v897
    %vm899 = vcmask 786112
    %v900 = vsel %vm899, %v898, %v893
    %v901 = vadd.s32 %v819, 4294967200
    %v902 = vlaneseq
    %v903 = vshrl.u32 %v902, 7
    %v904 = vsub.s32 %v901, %v903
    %v905 = vrot.slane %v798, %v904
    %vm906 = vcmask 851712
    %v907 = vsel %vm906, %v905, %v900
    %v908 = vadd.s32 %v819, 4294967192
    %v909 = vlaneseq
    %v910 = vshrl.u32 %v909, 7
    %v911 = vsub.s32 %v908, %v910
    %v912 = vrot.slane %v799, %v911
    %vm913 = vcmask 917312
    %v914 = vsel %vm913, %v912, %v907
    %v915 = vadd.s32 %v819, 4294967184
    %v916 = vlaneseq
    %v917 = vshrl.u32 %v916, 7
    %v918 = vsub.s32 %v915, %v917
    %v919 = vrot.slane %v800, %v918
    %vm920 = vcmask 982912
    %v921 = vsel %vm920, %v919, %v914
    %v922 = vadd.s32 %v819, 4294967176
    %v923 = vlaneseq
    %v924 = vshrl.u32 %v923, 7
    %v925 = vsub.s32 %v922, %v924
    %v926 = vrot.slane %v801, %v925
    %vm927 = vcmask 1048512
    %v928 = vsel %vm927, %v926, %v921
    %930 = vst [vmem:[#allocation3] sm:$0x1] %v928
    // Predicated region
    $region26: #{tpu_custom_call.1} parent=1 // pred_check
      _
    $region27: #{tpu_custom_call.1} parent=1 // pred_check_branch
      %932 = sbr.rel (0) target = $region29
    $region28: #{tpu_custom_call.1} parent=1 // pred_region
      %s934 = ssub.s32 16, 16
      %935 = vsyncadd [#allocation4], %s934
      %s937 = sshll.u32 [#allocation3], 4
      %s938 = int_to_ptr.vmem [resolvable:$true] %s937
      %940 = dma.vmem_to_hbm [thread:$0]  %s938, 16, %s6, [#allocation4]
    $region29: #{tpu_custom_call.1} parent=1 // pred_fallthru
      _
    // Predicated region
    $region30: #{tpu_custom_call.1} parent=1 // pred_check
      _
    $region31: #{tpu_custom_call.1} parent=1 // pred_check_branch
      %942 = sbr.rel (0) target = $region33
    $region32: #{tpu_custom_call.1} parent=1 // pred_region
      %943 = dma.done [#allocation4], 16
    $region33: #{tpu_custom_call.1} parent=1 // pred_fallthru
      _
    %944 = vsyncpa [#allocation4], 1

// kernel: tpu_custom_call.1
$region0: #{tpu_custom_call.1}
  #allocation0 [shape = 'u32[]', space=smem, size = 0x4, offset = 0x4, fixed_abs, tag = 'smem constant byte address 0x4 - core index']
  #allocation1 [shape = 'u32[144,128]{1,0:T(1,128)}', space=vmem, size = 0x12000, scoped, tag = 'internal scratch']
  #allocation2 [shape = 'f32[1,1]{1,0:T(1,128)S(6)}', space=smem, size = 0x200, scoped, tag = 'scoped memory for tpu_custom_call.1']
  %s0 = inlined_call_operand.vmem [shape: f32[128,16], index: 0, kind: input, shape index: {}]
  %s1 = inlined_call_operand.vmem [shape: bf16[16,32], index: 1, kind: input, shape index: {}]
  %s2 = inlined_call_operand.vmem [shape: bf16[3,32,32], index: 2, kind: input, shape index: {}]
  %s3 = inlined_call_operand.vmem [shape: f32[4,1,32], index: 3, kind: input, shape index: {}]
  %s4 = inlined_call_operand.vmem [shape: f32[1,32], index: 4, kind: input, shape index: {}]
  %s5 = inlined_call_operand.<no memory space> [shape: f32[1,1], index: 5, kind: input, shape index: {}]
  %s6 = inlined_call_operand.hbm [shape: f32[1,1,128], index: 6, kind: output, shape index: {}]
  %s7 = sld [smem:[#allocation0]]
  $region34: #{tpu_custom_call.1} parent=0
    _
  %s9 = ssub.s32 1, %s7
  %s10 = scalar_select 0, %s9, %s7
  %11 = sst [smem:[#allocation2]] %s5
  $region1: #{tpu_custom_call.1} parent=0
    #allocation3 [shape = 'u8[512]{0}', space=vmem, size = 0x400, scoped, tag = 'output window, operand 0, single buffered']
    #allocation4 [shape = 's32[1]{0}', space=sflag, size = 0x4, scoped, tag = 'scoped memory for tpu_custom_call.1']
    %12 = vsyncpa [#allocation4], 0
    // Predicated region
    $region2: #{tpu_custom_call.1} parent=1 // pred_check
      _
    $region3: #{tpu_custom_call.1} parent=1 // pred_check_branch
      %14 = sbr.rel (0) target = $region5
    $region4: #{tpu_custom_call.1} parent=1 // pred_region
      _
    $region5: #{tpu_custom_call.1} parent=1 // pred_fallthru
      _
    // Predicated region
    $region6: #{tpu_custom_call.1} parent=1 // pred_check
      _
    $region7: #{tpu_custom_call.1} parent=1 // pred_check_branch
      %16 = sbr.rel (0) target = $region9
    $region8: #{tpu_custom_call.1} parent=1 // pred_region
      _
    $region9: #{tpu_custom_call.1} parent=1 // pred_fallthru
      _
    // Predicated region
    $region10: #{tpu_custom_call.1} parent=1 // pred_check
      _
    $region11: #{tpu_custom_call.1} parent=1 // pred_check_branch
      %18 = sbr.rel (0) target = $region13
    $region12: #{tpu_custom_call.1} parent=1 // pred_region
      _
    $region13: #{tpu_custom_call.1} parent=1 // pred_fallthru
      _
    // Predicated region
    $region14: #{tpu_custom_call.1} parent=1 // pred_check
      _
    $region15: #{tpu_custom_call.1} parent=1 // pred_check_branch
      %20 = sbr.rel (0) target = $region17
    $region16: #{tpu_custom_call.1} parent=1 // pred_region
      _
    $region17: #{tpu_custom_call.1} parent=1 // pred_fallthru
      _
    // Predicated region
    $region18: #{tpu_custom_call.1} parent=1 // pred_check
      _
    $region19: #{tpu_custom_call.1} parent=1 // pred_check_branch
      %22 = sbr.rel (0) target = $region21
    $region20: #{tpu_custom_call.1} parent=1 // pred_region
      _
    $region21: #{tpu_custom_call.1} parent=1 // pred_fallthru
      _
    // Predicated region
    $region22: #{tpu_custom_call.1} parent=1 // pred_check
      _
    $region23: #{tpu_custom_call.1} parent=1 // pred_check_branch
      %24 = sbr.rel (0) target = $region25
    $region24: #{tpu_custom_call.1} parent=1 // pred_region
      _
    $region25: #{tpu_custom_call.1} parent=1 // pred_fallthru
      _
    %v26 = vld [vmem:[%s0] sm:$0xff]
    %v27 = vld [vmem:[%s0 + $0x8] sm:$0xff]
    %v28 = vld [vmem:[%s0 + $0x10] sm:$0xff]
    %v29 = vld [vmem:[%s0 + $0x18] sm:$0xff]
    %v30 = vld [vmem:[%s0 + $0x20] sm:$0xff]
    %v31 = vld [vmem:[%s0 + $0x28] sm:$0xff]
    %v32 = vld [vmem:[%s0 + $0x30] sm:$0xff]
    %v33 = vld [vmem:[%s0 + $0x38] sm:$0xff]
    %v34 = vld [vmem:[%s0 + $0x40] sm:$0xff]
    %v35 = vld [vmem:[%s0 + $0x48] sm:$0xff]
    %v36 = vld [vmem:[%s0 + $0x50] sm:$0xff]
    %v37 = vld [vmem:[%s0 + $0x58] sm:$0xff]
    %v38 = vld [vmem:[%s0 + $0x60] sm:$0xff]
    %v39 = vld [vmem:[%s0 + $0x68] sm:$0xff]
    %v40 = vld [vmem:[%s0 + $0x70] sm:$0xff]
    %v41 = vld [vmem:[%s0 + $0x78] sm:$0xff]
    %v42 = vpack.c.bf16 %v27, %v26
    %v43 = vpack.c.bf16 %v29, %v28
    %v44 = vpack.c.bf16 %v31, %v30
    %v45 = vpack.c.bf16 %v33, %v32
    %v46 = vpack.c.bf16 %v35, %v34
    %v47 = vpack.c.bf16 %v37, %v36
    %v48 = vpack.c.bf16 %v39, %v38
    %v49 = vpack.c.bf16 %v41, %v40
    %v50 = vld [vmem:[%s1] sm:$0xf]
    %v51 = vld [vmem:[%s1 + $0x4] sm:$0xf]
    %v52 = vld [vmem:[%s3] sm:$0x1]
    %v54 = vlaneseq
    %v55 = vshrl.u32 %v54, 7
    %v56 = vsub.s32 0, %v55
    %v57 = vrot.slane %v52, %v56
    %v61 = vunpack.c.l.b16 %v50
    %v62 = vunpack.c.l.b16 %v51
    %v63 = vpack.c.b16 %v62, %v61
    %vm65 = vcmask 130048
    %v67 = vsel %vm65, %v42, 0
    %v70 = vsel %vm65, %v43, 0
    %v73 = vsel %vm65, %v44, 0
    %v76 = vsel %vm65, %v45, 0
    %v79 = vsel %vm65, %v46, 0
    %v82 = vsel %vm65, %v47, 0
    %v85 = vsel %vm65, %v48, 0
    %v88 = vsel %vm65, %v49, 0
    %90 = vmatprep.subr.bf16.mxu0 0
    %91 = vmatpush1.bf16.msra.mxu0 %v63
    %92 = vmatprep.subr.bf16.mxu0 0
    %93 = vmatpush1.bf16.msra.mxu0 0
    %94 = vmatprep.subr.bf16.mxu0 0
    %95 = vmatpush1.bf16.msra.mxu0 0
    %96 = vmatprep.subr.bf16.mxu0 0
    %97 = vmatpush1.bf16.msra.mxu0 0
    %98 = vmatprep.subr.bf16.mxu0 0
    %99 = vmatpush1.bf16.msra.mxu0 0
    %100 = vmatprep.subr.bf16.mxu0 0
    %101 = vmatpush1.bf16.msra.mxu0 0
    %102 = vmatprep.subr.bf16.mxu0 0
    %103 = vmatpush1.bf16.msra.mxu0 0
    %104 = vmatprep.subr.bf16.mxu0 0
    %105 = vmatpush1.bf16.msra.mxu0 0
    %106 = vmatprep.subr.bf16.mxu0 0
    %107 = vmatpush1.bf16.msra.mxu0 0
    %108 = vmatprep.subr.bf16.mxu0 0
    %109 = vmatpush1.bf16.msra.mxu0 0
    %110 = vmatprep.subr.bf16.mxu0 0
    %111 = vmatpush1.bf16.msra.mxu0 0
    %112 = vmatprep.subr.bf16.mxu0 0
    %113 = vmatpush1.bf16.msra.mxu0 0
    %114 = vmatprep.subr.bf16.mxu0 0
    %115 = vmatpush1.bf16.msra.mxu0 0
    %116 = vmatprep.subr.bf16.mxu0 0
    %117 = vmatpush1.bf16.msra.mxu0 0
    %118 = vmatprep.subr.bf16.mxu0 0
    %119 = vmatpush1.bf16.msra.mxu0 0
    %120 = vmatprep.subr.bf16.mxu0 0
    %121 = vmatpush1.bf16.msra.mxu0 0
    %122 = vmatprep.mubr.bf16.mxu0 0
    %123 = vmatmul.mubr.bf16.gmra.mrb[0].mxu0 %v67
    %v124 = vpop.f32.mrb[0].mxu0
    %v125 = vadd.f32 %v57, %v124
    %v126 = vpop.f32.mrb[0].mxu0
    %v127 = vpop.f32.mrb[0].mxu0
    %v128 = vadd.f32 %v57, %v127
    %v129 = vpop.f32.mrb[0].mxu0
    %130 = vmatprep.mubr.bf16.mxu0 0
    %131 = vmatmul.mubr.bf16.gmra.mrb[0].mxu0 %v70
    %v132 = vpop.f32.mrb[0].mxu0
    %v133 = vadd.f32 %v57, %v132
    %v134 = vpop.f32.mrb[0].mxu0
    %v135 = vpop.f32.mrb[0].mxu0
    %v136 = vadd.f32 %v57, %v135
    %v137 = vpop.f32.mrb[0].mxu0
    %138 = vmatprep.mubr.bf16.mxu0 0
    %139 = vmatmul.mubr.bf16.gmra.mrb[0].mxu0 %v73
    %v140 = vpop.f32.mrb[0].mxu0
    %v141 = vadd.f32 %v57, %v140
    %v142 = vpop.f32.mrb[0].mxu0
    %v143 = vpop.f32.mrb[0].mxu0
    %v144 = vadd.f32 %v57, %v143
    %v145 = vpop.f32.mrb[0].mxu0
    %146 = vmatprep.mubr.bf16.mxu0 0
    %147 = vmatmul.mubr.bf16.gmra.mrb[0].mxu0 %v76
    %v148 = vpop.f32.mrb[0].mxu0
    %v149 = vadd.f32 %v57, %v148
    %v150 = vpop.f32.mrb[0].mxu0
    %v151 = vpop.f32.mrb[0].mxu0
    %v152 = vadd.f32 %v57, %v151
    %v153 = vpop.f32.mrb[0].mxu0
    %154 = vmatprep.mubr.bf16.mxu0 0
    %155 = vmatmul.mubr.bf16.gmra.mrb[0].mxu0 %v79
    %v156 = vpop.f32.mrb[0].mxu0
    %v157 = vadd.f32 %v57, %v156
    %v158 = vpop.f32.mrb[0].mxu0
    %v159 = vpop.f32.mrb[0].mxu0
    %v160 = vadd.f32 %v57, %v159
    %v161 = vpop.f32.mrb[0].mxu0
    %162 = vmatprep.mubr.bf16.mxu0 0
    %163 = vmatmul.mubr.bf16.gmra.mrb[0].mxu0 %v82
    %v164 = vpop.f32.mrb[0].mxu0
    %v165 = vadd.f32 %v57, %v164
    %v166 = vpop.f32.mrb[0].mxu0
    %v167 = vpop.f32.mrb[0].mxu0
    %v168 = vadd.f32 %v57, %v167
    %v169 = vpop.f32.mrb[0].mxu0
    %170 = vmatprep.mubr.bf16.mxu0 0
    %171 = vmatmul.mubr.bf16.gmra.mrb[0].mxu0 %v85
    %v172 = vpop.f32.mrb[0].mxu0
    %v173 = vadd.f32 %v57, %v172
    %v174 = vpop.f32.mrb[0].mxu0
    %v175 = vpop.f32.mrb[0].mxu0
    %v176 = vadd.f32 %v57, %v175
    %v177 = vpop.f32.mrb[0].mxu0
    %178 = vmatprep.mubr.bf16.mxu0 0
    %179 = vmatmul.mubr.bf16.gmra.mrb[0].mxu0 %v88
    %v180 = vpop.f32.mrb[0].mxu0
    %v181 = vadd.f32 %v57, %v180
    %v182 = vpop.f32.mrb[0].mxu0
    %v183 = vpop.f32.mrb[0].mxu0
    %v184 = vadd.f32 %v57, %v183
    %v185 = vpop.f32.mrb[0].mxu0
    %186 = vdwg.mxu0
    %v187 = vmax.f32 %v125, 0.0
    %v188 = vmax.f32 %v128, 0.0
    %v189 = vmax.f32 %v133, 0.0
    %v190 = vmax.f32 %v136, 0.0
    %v191 = vmax.f32 %v141, 0.0
    %v192 = vmax.f32 %v144, 0.0
    %v193 = vmax.f32 %v149, 0.0
    %v194 = vmax.f32 %v152, 0.0
    %v195 = vmax.f32 %v157, 0.0
    %v196 = vmax.f32 %v160, 0.0
    %v197 = vmax.f32 %v165, 0.0
    %v198 = vmax.f32 %v168, 0.0
    %v199 = vmax.f32 %v173, 0.0
    %v200 = vmax.f32 %v176, 0.0
    %v201 = vmax.f32 %v181, 0.0
    %v202 = vmax.f32 %v184, 0.0
    %v203 = vpack.c.bf16 %v188, %v187
    %v204 = vpack.c.bf16 %v190, %v189
    %v205 = vpack.c.bf16 %v192, %v191
    %v206 = vpack.c.bf16 %v194, %v193
    %v207 = vpack.c.bf16 %v196, %v195
    %v208 = vpack.c.bf16 %v198, %v197
    %v209 = vpack.c.bf16 %v200, %v199
    %v210 = vpack.c.bf16 %v202, %v201
    %v211 = vld [vmem:[%s2] sm:$0xf]
    %v212 = vld [vmem:[%s2 + $0x4] sm:$0xf]
    %v213 = vld [vmem:[%s2 + $0x8] sm:$0xf]
    %v214 = vld [vmem:[%s2 + $0xc] sm:$0xf]
    %s215 = scalar_lea.vmem %s3, 1
    %v216 = vld [vmem:[%s215] sm:$0x1]
    %v218 = vlaneseq
    %v219 = vshrl.u32 %v218, 7
    %v220 = vsub.s32 0, %v219
    %v221 = vrot.slane %v216, %v220
    %v227 = vunpack.c.l.b16 %v211
    %v228 = vunpack.c.l.b16 %v212
    %v229 = vunpack.c.l.b16 %v213
    %v230 = vunpack.c.l.b16 %v214
    %v231 = vpack.c.b16 %v228, %v227
    %v232 = vpack.c.b16 %v230, %v229
    %vm235 = vcmask 261120
    %v237 = vsel %vm235, %v203, 0
    %v240 = vsel %vm235, %v204, 0
    %v243 = vsel %vm235, %v205, 0
    %v246 = vsel %vm235, %v206, 0
    %v249 = vsel %vm235, %v207, 0
    %v252 = vsel %vm235, %v208, 0
    %v255 = vsel %vm235, %v209, 0
    %v258 = vsel %vm235, %v210, 0
    %260 = vmatprep.subr.bf16.mxu0 0
    %261 = vmatpush1.bf16.msra.mxu0 %v231
    %262 = vmatprep.subr.bf16.mxu0 0
    %263 = vmatpush1.bf16.msra.mxu0 %v232
    %264 = vmatprep.subr.bf16.mxu0 0
    %265 = vmatpush1.bf16.msra.mxu0 0
    %266 = vmatprep.subr.bf16.mxu0 0
    %267 = vmatpush1.bf16.msra.mxu0 0
    %268 = vmatprep.subr.bf16.mxu0 0
    %269 = vmatpush1.bf16.msra.mxu0 0
    %270 = vmatprep.subr.bf16.mxu0 0
    %271 = vmatpush1.bf16.msra.mxu0 0
    %272 = vmatprep.subr.bf16.mxu0 0
    %273 = vmatpush1.bf16.msra.mxu0 0
    %274 = vmatprep.subr.bf16.mxu0 0
    %275 = vmatpush1.bf16.msra.mxu0 0
    %276 = vmatprep.subr.bf16.mxu0 0
    %277 = vmatpush1.bf16.msra.mxu0 0
    %278 = vmatprep.subr.bf16.mxu0 0
    %279 = vmatpush1.bf16.msra.mxu0 0
    %280 = vmatprep.subr.bf16.mxu0 0
    %281 = vmatpush1.bf16.msra.mxu0 0
    %282 = vmatprep.subr.bf16.mxu0 0
    %283 = vmatpush1.bf16.msra.mxu0 0
    %284 = vmatprep.subr.bf16.mxu0 0
    %285 = vmatpush1.bf16.msra.mxu0 0
    %286 = vmatprep.subr.bf16.mxu0 0
    %287 = vmatpush1.bf16.msra.mxu0 0
    %288 = vmatprep.subr.bf16.mxu0 0
    %289 = vmatpush1.bf16.msra.mxu0 0
    %290 = vmatprep.subr.bf16.mxu0 0
    %291 = vmatpush1.bf16.msra.mxu0 0
    %292 = vmatprep.mubr.bf16.mxu0 0
    %293 = vmatmul.mubr.bf16.gmra.mrb[0].mxu0 %v237
    %v294 = vpop.f32.mrb[0].mxu0
    %v295 = vadd.f32 %v221, %v294
    %v296 = vpop.f32.mrb[0].mxu0
    %v297 = vpop.f32.mrb[0].mxu0
    %v298 = vadd.f32 %v221, %v297
    %v299 = vpop.f32.mrb[0].mxu0
    %300 = vmatprep.mubr.bf16.mxu0 0
    %301 = vmatmul.mubr.bf16.gmra.mrb[0].mxu0 %v240
    %v302 = vpop.f32.mrb[0].mxu0
    %v303 = vadd.f32 %v221, %v302
    %v304 = vpop.f32.mrb[0].mxu0
    %v305 = vpop.f32.mrb[0].mxu0
    %v306 = vadd.f32 %v221, %v305
    %v307 = vpop.f32.mrb[0].mxu0
    %308 = vmatprep.mubr.bf16.mxu0 0
    %309 = vmatmul.mubr.bf16.gmra.mrb[0].mxu0 %v243
    %v310 = vpop.f32.mrb[0].mxu0
    %v311 = vadd.f32 %v221, %v310
    %v312 = vpop.f32.mrb[0].mxu0
    %v313 = vpop.f32.mrb[0].mxu0
    %v314 = vadd.f32 %v221, %v313
    %v315 = vpop.f32.mrb[0].mxu0
    %316 = vmatprep.mubr.bf16.mxu0 0
    %317 = vmatmul.mubr.bf16.gmra.mrb[0].mxu0 %v246
    %v318 = vpop.f32.mrb[0].mxu0
    %v319 = vadd.f32 %v221, %v318
    %v320 = vpop.f32.mrb[0].mxu0
    %v321 = vpop.f32.mrb[0].mxu0
    %v322 = vadd.f32 %v221, %v321
    %v323 = vpop.f32.mrb[0].mxu0
    %324 = vmatprep.mubr.bf16.mxu0 0
    %325 = vmatmul.mubr.bf16.gmra.mrb[0].mxu0 %v249
    %v326 = vpop.f32.mrb[0].mxu0
    %v327 = vadd.f32 %v221, %v326
    %v328 = vpop.f32.mrb[0].mxu0
    %v329 = vpop.f32.mrb[0].mxu0
    %v330 = vadd.f32 %v221, %v329
    %v331 = vpop.f32.mrb[0].mxu0
    %332 = vmatprep.mubr.bf16.mxu0 0
    %333 = vmatmul.mubr.bf16.gmra.mrb[0].mxu0 %v252
    %v334 = vpop.f32.mrb[0].mxu0
    %v335 = vadd.f32 %v221, %v334
    %v336 = vpop.f32.mrb[0].mxu0
    %v337 = vpop.f32.mrb[0].mxu0
    %v338 = vadd.f32 %v221, %v337
    %v339 = vpop.f32.mrb[0].mxu0
    %340 = vmatprep.mubr.bf16.mxu0 0
    %341 = vmatmul.mubr.bf16.gmra.mrb[0].mxu0 %v255
    %v342 = vpop.f32.mrb[0].mxu0
    %v343 = vadd.f32 %v221, %v342
    %v344 = vpop.f32.mrb[0].mxu0
    %v345 = vpop.f32.mrb[0].mxu0
    %v346 = vadd.f32 %v221, %v345
    %v347 = vpop.f32.mrb[0].mxu0
    %348 = vmatprep.mubr.bf16.mxu0 0
    %349 = vmatmul.mubr.bf16.gmra.mrb[0].mxu0 %v258
    %v350 = vpop.f32.mrb[0].mxu0
    %v351 = vadd.f32 %v221, %v350
    %v352 = vpop.f32.mrb[0].mxu0
    %v353 = vpop.f32.mrb[0].mxu0
    %v354 = vadd.f32 %v221, %v353
    %v355 = vpop.f32.mrb[0].mxu0
    %356 = vdwg.mxu0
    %v357 = vmax.f32 %v295, 0.0
    %v358 = vmax.f32 %v298, 0.0
    %v359 = vmax.f32 %v303, 0.0
    %v360 = vmax.f32 %v306, 0.0
    %v361 = vmax.f32 %v311, 0.0
    %v362 = vmax.f32 %v314, 0.0
    %v363 = vmax.f32 %v319, 0.0
    %v364 = vmax.f32 %v322, 0.0
    %v365 = vmax.f32 %v327, 0.0
    %v366 = vmax.f32 %v330, 0.0
    %v367 = vmax.f32 %v335, 0.0
    %v368 = vmax.f32 %v338, 0.0
    %v369 = vmax.f32 %v343, 0.0
    %v370 = vmax.f32 %v346, 0.0
    %v371 = vmax.f32 %v351, 0.0
    %v372 = vmax.f32 %v354, 0.0
    %v373 = vpack.c.bf16 %v358, %v357
    %v374 = vpack.c.bf16 %v360, %v359
    %v375 = vpack.c.bf16 %v362, %v361
    %v376 = vpack.c.bf16 %v364, %v363
    %v377 = vpack.c.bf16 %v366, %v365
    %v378 = vpack.c.bf16 %v368, %v367
    %v379 = vpack.c.bf16 %v370, %v369
    %v380 = vpack.c.bf16 %v372, %v371
    %s381 = scalar_lea.vmem %s2, 16
    %v382 = vld [vmem:[%s381] sm:$0xf]
    %v383 = vld [vmem:[%s381 + $0x4] sm:$0xf]
    %v384 = vld [vmem:[%s381 + $0x8] sm:$0xf]
    %v385 = vld [vmem:[%s381 + $0xc] sm:$0xf]
    %s386 = scalar_lea.vmem %s3, 2
    %v387 = vld [vmem:[%s386] sm:$0x1]
    %v389 = vlaneseq
    %v390 = vshrl.u32 %v389, 7
    %v391 = vsub.s32 0, %v390
    %v392 = vrot.slane %v387, %v391
    %v398 = vunpack.c.l.b16 %v382
    %v399 = vunpack.c.l.b16 %v383
    %v400 = vunpack.c.l.b16 %v384
    %v401 = vunpack.c.l.b16 %v385
    %v402 = vpack.c.b16 %v399, %v398
    %v403 = vpack.c.b16 %v401, %v400
    %v407 = vsel %vm235, %v373, 0
    %v410 = vsel %vm235, %v374, 0
    %v413 = vsel %vm235, %v375, 0
    %v416 = vsel %vm235, %v376, 0
    %v419 = vsel %vm235, %v377, 0
    %v422 = vsel %vm235, %v378, 0
    %v425 = vsel %vm235, %v379, 0
    %v428 = vsel %vm235, %v380, 0
    %430 = vmatprep.subr.bf16.mxu0 0
    %431 = vmatpush1.bf16.msra.mxu0 %v402
    %432 = vmatprep.subr.bf16.mxu0 0
    %433 = vmatpush1.bf16.msra.mxu0 %v403
    %434 = vmatprep.subr.bf16.mxu0 0
    %435 = vmatpush1.bf16.msra.mxu0 0
    %436 = vmatprep.subr.bf16.mxu0 0
    %437 = vmatpush1.bf16.msra.mxu0 0
    %438 = vmatprep.subr.bf16.mxu0 0
    %439 = vmatpush1.bf16.msra.mxu0 0
    %440 = vmatprep.subr.bf16.mxu0 0
    %441 = vmatpush1.bf16.msra.mxu0 0
    %442 = vmatprep.subr.bf16.mxu0 0
    %443 = vmatpush1.bf16.msra.mxu0 0
    %444 = vmatprep.subr.bf16.mxu0 0
    %445 = vmatpush1.bf16.msra.mxu0 0
    %446 = vmatprep.subr.bf16.mxu0 0
    %447 = vmatpush1.bf16.msra.mxu0 0
    %448 = vmatprep.subr.bf16.mxu0 0
    %449 = vmatpush1.bf16.msra.mxu0 0
    %450 = vmatprep.subr.bf16.mxu0 0
    %451 = vmatpush1.bf16.msra.mxu0 0
    %452 = vmatprep.subr.bf16.mxu0 0
    %453 = vmatpush1.bf16.msra.mxu0 0
    %454 = vmatprep.subr.bf16.mxu0 0
    %455 = vmatpush1.bf16.msra.mxu0 0
    %456 = vmatprep.subr.bf16.mxu0 0
    %457 = vmatpush1.bf16.msra.mxu0 0
    %458 = vmatprep.subr.bf16.mxu0 0
    %459 = vmatpush1.bf16.msra.mxu0 0
    %460 = vmatprep.subr.bf16.mxu0 0
    %461 = vmatpush1.bf16.msra.mxu0 0
    %462 = vmatprep.mubr.bf16.mxu0 0
    %463 = vmatmul.mubr.bf16.gmra.mrb[0].mxu0 %v407
    %v464 = vpop.f32.mrb[0].mxu0
    %v465 = vadd.f32 %v392, %v464
    %v466 = vpop.f32.mrb[0].mxu0
    %v467 = vpop.f32.mrb[0].mxu0
    %v468 = vadd.f32 %v392, %v467
    %v469 = vpop.f32.mrb[0].mxu0
    %470 = vmatprep.mubr.bf16.mxu0 0
    %471 = vmatmul.mubr.bf16.gmra.mrb[0].mxu0 %v410
    %v472 = vpop.f32.mrb[0].mxu0
    %v473 = vadd.f32 %v392, %v472
    %v474 = vpop.f32.mrb[0].mxu0
    %v475 = vpop.f32.mrb[0].mxu0
    %v476 = vadd.f32 %v392, %v475
    %v477 = vpop.f32.mrb[0].mxu0
    %478 = vmatprep.mubr.bf16.mxu0 0
    %479 = vmatmul.mubr.bf16.gmra.mrb[0].mxu0 %v413
    %v480 = vpop.f32.mrb[0].mxu0
    %v481 = vadd.f32 %v392, %v480
    %v482 = vpop.f32.mrb[0].mxu0
    %v483 = vpop.f32.mrb[0].mxu0
    %v484 = vadd.f32 %v392, %v483
    %v485 = vpop.f32.mrb[0].mxu0
    %486 = vmatprep.mubr.bf16.mxu0 0
    %487 = vmatmul.mubr.bf16.gmra.mrb[0].mxu0 %v416
    %v488 = vpop.f32.mrb[0].mxu0
    %v489 = vadd.f32 %v392, %v488
    %v490 = vpop.f32.mrb[0].mxu0
    %v491 = vpop.f32.mrb[0].mxu0
    %v492 = vadd.f32 %v392, %v491
    %v493 = vpop.f32.mrb[0].mxu0
    %494 = vmatprep.mubr.bf16.mxu0 0
    %495 = vmatmul.mubr.bf16.gmra.mrb[0].mxu0 %v419
    %v496 = vpop.f32.mrb[0].mxu0
    %v497 = vadd.f32 %v392, %v496
    %v498 = vpop.f32.mrb[0].mxu0
    %v499 = vpop.f32.mrb[0].mxu0
    %v500 = vadd.f32 %v392, %v499
    %v501 = vpop.f32.mrb[0].mxu0
    %502 = vmatprep.mubr.bf16.mxu0 0
    %503 = vmatmul.mubr.bf16.gmra.mrb[0].mxu0 %v422
    %v504 = vpop.f32.mrb[0].mxu0
    %v505 = vadd.f32 %v392, %v504
    %v506 = vpop.f32.mrb[0].mxu0
    %v507 = vpop.f32.mrb[0].mxu0
    %v508 = vadd.f32 %v392, %v507
    %v509 = vpop.f32.mrb[0].mxu0
    %510 = vmatprep.mubr.bf16.mxu0 0
    %511 = vmatmul.mubr.bf16.gmra.mrb[0].mxu0 %v425
    %v512 = vpop.f32.mrb[0].mxu0
    %v513 = vadd.f32 %v392, %v512
    %v514 = vpop.f32.mrb[0].mxu0
    %v515 = vpop.f32.mrb[0].mxu0
    %v516 = vadd.f32 %v392, %v515
    %v517 = vpop.f32.mrb[0].mxu0
    %518 = vmatprep.mubr.bf16.mxu0 0
    %519 = vmatmul.mubr.bf16.gmra.mrb[0].mxu0 %v428
    %v520 = vpop.f32.mrb[0].mxu0
    %v521 = vadd.f32 %v392, %v520
    %v522 = vpop.f32.mrb[0].mxu0
    %v523 = vpop.f32.mrb[0].mxu0
    %v524 = vadd.f32 %v392, %v523
    %v525 = vpop.f32.mrb[0].mxu0
    %526 = vdwg.mxu0
    %v527 = vmax.f32 %v465, 0.0
    %v528 = vmax.f32 %v468, 0.0
    %v529 = vmax.f32 %v473, 0.0
    %v530 = vmax.f32 %v476, 0.0
    %v531 = vmax.f32 %v481, 0.0
    %v532 = vmax.f32 %v484, 0.0
    %v533 = vmax.f32 %v489, 0.0
    %v534 = vmax.f32 %v492, 0.0
    %v535 = vmax.f32 %v497, 0.0
    %v536 = vmax.f32 %v500, 0.0
    %v537 = vmax.f32 %v505, 0.0
    %v538 = vmax.f32 %v508, 0.0
    %v539 = vmax.f32 %v513, 0.0
    %v540 = vmax.f32 %v516, 0.0
    %v541 = vmax.f32 %v521, 0.0
    %v542 = vmax.f32 %v524, 0.0
    %v543 = vpack.c.bf16 %v528, %v527
    %v544 = vpack.c.bf16 %v530, %v529
    %v545 = vpack.c.bf16 %v532, %v531
    %v546 = vpack.c.bf16 %v534, %v533
    %v547 = vpack.c.bf16 %v536, %v535
    %v548 = vpack.c.bf16 %v538, %v537
    %v549 = vpack.c.bf16 %v540, %v539
    %v550 = vpack.c.bf16 %v542, %v541
    %s551 = scalar_lea.vmem %s2, 32
    %v552 = vld [vmem:[%s551] sm:$0xf]
    %v553 = vld [vmem:[%s551 + $0x4] sm:$0xf]
    %v554 = vld [vmem:[%s551 + $0x8] sm:$0xf]
    %v555 = vld [vmem:[%s551 + $0xc] sm:$0xf]
    %s556 = scalar_lea.vmem %s3, 3
    %v557 = vld [vmem:[%s556] sm:$0x1]
    %v559 = vlaneseq
    %v560 = vshrl.u32 %v559, 7
    %v561 = vsub.s32 0, %v560
    %v562 = vrot.slane %v557, %v561
    %v568 = vunpack.c.l.b16 %v552
    %v569 = vunpack.c.l.b16 %v553
    %v570 = vunpack.c.l.b16 %v554
    %v571 = vunpack.c.l.b16 %v555
    %v572 = vpack.c.b16 %v569, %v568
    %v573 = vpack.c.b16 %v571, %v570
    %v577 = vsel %vm235, %v543, 0
    %v580 = vsel %vm235, %v544, 0
    %v583 = vsel %vm235, %v545, 0
    %v586 = vsel %vm235, %v546, 0
    %v589 = vsel %vm235, %v547, 0
    %v592 = vsel %vm235, %v548, 0
    %v595 = vsel %vm235, %v549, 0
    %v598 = vsel %vm235, %v550, 0
    %600 = vmatprep.subr.bf16.mxu0 0
    %601 = vmatpush1.bf16.msra.mxu0 %v572
    %602 = vmatprep.subr.bf16.mxu0 0
    %603 = vmatpush1.bf16.msra.mxu0 %v573
    %604 = vmatprep.subr.bf16.mxu0 0
    %605 = vmatpush1.bf16.msra.mxu0 0
    %606 = vmatprep.subr.bf16.mxu0 0
    %607 = vmatpush1.bf16.msra.mxu0 0
    %608 = vmatprep.subr.bf16.mxu0 0
    %609 = vmatpush1.bf16.msra.mxu0 0
    %610 = vmatprep.subr.bf16.mxu0 0
    %611 = vmatpush1.bf16.msra.mxu0 0
    %612 = vmatprep.subr.bf16.mxu0 0
    %613 = vmatpush1.bf16.msra.mxu0 0
    %614 = vmatprep.subr.bf16.mxu0 0
    %615 = vmatpush1.bf16.msra.mxu0 0
    %616 = vmatprep.subr.bf16.mxu0 0
    %617 = vmatpush1.bf16.msra.mxu0 0
    %618 = vmatprep.subr.bf16.mxu0 0
    %619 = vmatpush1.bf16.msra.mxu0 0
    %620 = vmatprep.subr.bf16.mxu0 0
    %621 = vmatpush1.bf16.msra.mxu0 0
    %622 = vmatprep.subr.bf16.mxu0 0
    %623 = vmatpush1.bf16.msra.mxu0 0
    %624 = vmatprep.subr.bf16.mxu0 0
    %625 = vmatpush1.bf16.msra.mxu0 0
    %626 = vmatprep.subr.bf16.mxu0 0
    %627 = vmatpush1.bf16.msra.mxu0 0
    %628 = vmatprep.subr.bf16.mxu0 0
    %629 = vmatpush1.bf16.msra.mxu0 0
    %630 = vmatprep.subr.bf16.mxu0 0
    %631 = vmatpush1.bf16.msra.mxu0 0
    %632 = vmatprep.mubr.bf16.mxu0 0
    %633 = vmatmul.mubr.bf16.gmra.mrb[0].mxu0 %v577
    %v634 = vpop.f32.mrb[0].mxu0
    %v635 = vadd.f32 %v562, %v634
    %v636 = vpop.f32.mrb[0].mxu0
    %v637 = vpop.f32.mrb[0].mxu0
    %v638 = vadd.f32 %v562, %v637
    %v639 = vpop.f32.mrb[0].mxu0
    %640 = vmatprep.mubr.bf16.mxu0 0
    %641 = vmatmul.mubr.bf16.gmra.mrb[0].mxu0 %v580
    %v642 = vpop.f32.mrb[0].mxu0
    %v643 = vadd.f32 %v562, %v642
    %v644 = vpop.f32.mrb[0].mxu0
    %v645 = vpop.f32.mrb[0].mxu0
    %v646 = vadd.f32 %v562, %v645
    %v647 = vpop.f32.mrb[0].mxu0
    %648 = vmatprep.mubr.bf16.mxu0 0
    %649 = vmatmul.mubr.bf16.gmra.mrb[0].mxu0 %v583
    %v650 = vpop.f32.mrb[0].mxu0
    %v651 = vadd.f32 %v562, %v650
    %v652 = vpop.f32.mrb[0].mxu0
    %v653 = vpop.f32.mrb[0].mxu0
    %v654 = vadd.f32 %v562, %v653
    %v655 = vpop.f32.mrb[0].mxu0
    %656 = vmatprep.mubr.bf16.mxu0 0
    %657 = vmatmul.mubr.bf16.gmra.mrb[0].mxu0 %v586
    %v658 = vpop.f32.mrb[0].mxu0
    %v659 = vadd.f32 %v562, %v658
    %v660 = vpop.f32.mrb[0].mxu0
    %v661 = vpop.f32.mrb[0].mxu0
    %v662 = vadd.f32 %v562, %v661
    %v663 = vpop.f32.mrb[0].mxu0
    %664 = vmatprep.mubr.bf16.mxu0 0
    %665 = vmatmul.mubr.bf16.gmra.mrb[0].mxu0 %v589
    %v666 = vpop.f32.mrb[0].mxu0
    %v667 = vadd.f32 %v562, %v666
    %v668 = vpop.f32.mrb[0].mxu0
    %v669 = vpop.f32.mrb[0].mxu0
    %v670 = vadd.f32 %v562, %v669
    %v671 = vpop.f32.mrb[0].mxu0
    %672 = vmatprep.mubr.bf16.mxu0 0
    %673 = vmatmul.mubr.bf16.gmra.mrb[0].mxu0 %v592
    %v674 = vpop.f32.mrb[0].mxu0
    %v675 = vadd.f32 %v562, %v674
    %v676 = vpop.f32.mrb[0].mxu0
    %v677 = vpop.f32.mrb[0].mxu0
    %v678 = vadd.f32 %v562, %v677
    %v679 = vpop.f32.mrb[0].mxu0
    %680 = vmatprep.mubr.bf16.mxu0 0
    %681 = vmatmul.mubr.bf16.gmra.mrb[0].mxu0 %v595
    %v682 = vpop.f32.mrb[0].mxu0
    %v683 = vadd.f32 %v562, %v682
    %v684 = vpop.f32.mrb[0].mxu0
    %v685 = vpop.f32.mrb[0].mxu0
    %v686 = vadd.f32 %v562, %v685
    %v687 = vpop.f32.mrb[0].mxu0
    %688 = vmatprep.mubr.bf16.mxu0 0
    %689 = vmatmul.mubr.bf16.gmra.mrb[0].mxu0 %v598
    %v690 = vpop.f32.mrb[0].mxu0
    %v691 = vadd.f32 %v562, %v690
    %v692 = vpop.f32.mrb[0].mxu0
    %v693 = vpop.f32.mrb[0].mxu0
    %v694 = vadd.f32 %v562, %v693
    %v695 = vpop.f32.mrb[0].mxu0
    %696 = vdwg.mxu0
    %v697 = vmax.f32 %v635, 0.0
    %v698 = vmax.f32 %v638, 0.0
    %v699 = vmax.f32 %v643, 0.0
    %v700 = vmax.f32 %v646, 0.0
    %v701 = vmax.f32 %v651, 0.0
    %v702 = vmax.f32 %v654, 0.0
    %v703 = vmax.f32 %v659, 0.0
    %v704 = vmax.f32 %v662, 0.0
    %v705 = vmax.f32 %v667, 0.0
    %v706 = vmax.f32 %v670, 0.0
    %v707 = vmax.f32 %v675, 0.0
    %v708 = vmax.f32 %v678, 0.0
    %v709 = vmax.f32 %v683, 0.0
    %v710 = vmax.f32 %v686, 0.0
    %v711 = vmax.f32 %v691, 0.0
    %v712 = vmax.f32 %v694, 0.0
    %v713 = vld [vmem:[%s4] sm:$0x1]
    %v715 = vlaneseq
    %v716 = vshrl.u32 %v715, 7
    %v717 = vsub.s32 0, %v716
    %v718 = vrot.slane %v713, %v717
    %v720 = vmul.f32 %v697, %v718
    %v721 = vmul.f32 %v698, %v718
    %v722 = vmul.f32 %v699, %v718
    %v723 = vmul.f32 %v700, %v718
    %v724 = vmul.f32 %v701, %v718
    %v725 = vmul.f32 %v702, %v718
    %v726 = vmul.f32 %v703, %v718
    %v727 = vmul.f32 %v704, %v718
    %v728 = vmul.f32 %v705, %v718
    %v729 = vmul.f32 %v706, %v718
    %v730 = vmul.f32 %v707, %v718
    %v731 = vmul.f32 %v708, %v718
    %v732 = vmul.f32 %v709, %v718
    %v733 = vmul.f32 %v710, %v718
    %v734 = vmul.f32 %v711, %v718
    %v735 = vmul.f32 %v712, %v718
    %v736 = vsel %vm235, %v720, 0.0
    %737 = vadd.xlane.f32.xlu0 %v736
    %v738 = vpop.xlane.xlu0 %737
    %v739 = vsel %vm235, %v721, 0.0
    %740 = vadd.xlane.f32.xlu0 %v739
    %v741 = vpop.xlane.xlu0 %740
    %v742 = vsel %vm235, %v722, 0.0
    %743 = vadd.xlane.f32.xlu0 %v742
    %v744 = vpop.xlane.xlu0 %743
    %v745 = vsel %vm235, %v723, 0.0
    %746 = vadd.xlane.f32.xlu0 %v745
    %v747 = vpop.xlane.xlu0 %746
    %v748 = vsel %vm235, %v724, 0.0
    %749 = vadd.xlane.f32.xlu0 %v748
    %v750 = vpop.xlane.xlu0 %749
    %v751 = vsel %vm235, %v725, 0.0
    %752 = vadd.xlane.f32.xlu0 %v751
    %v753 = vpop.xlane.xlu0 %752
    %v754 = vsel %vm235, %v726, 0.0
    %755 = vadd.xlane.f32.xlu0 %v754
    %v756 = vpop.xlane.xlu0 %755
    %v757 = vsel %vm235, %v727, 0.0
    %758 = vadd.xlane.f32.xlu0 %v757
    %v759 = vpop.xlane.xlu0 %758
    %v760 = vsel %vm235, %v728, 0.0
    %761 = vadd.xlane.f32.xlu0 %v760
    %v762 = vpop.xlane.xlu0 %761
    %v763 = vsel %vm235, %v729, 0.0
    %764 = vadd.xlane.f32.xlu0 %v763
    %v765 = vpop.xlane.xlu0 %764
    %v766 = vsel %vm235, %v730, 0.0
    %767 = vadd.xlane.f32.xlu0 %v766
    %v768 = vpop.xlane.xlu0 %767
    %v769 = vsel %vm235, %v731, 0.0
    %770 = vadd.xlane.f32.xlu0 %v769
    %v771 = vpop.xlane.xlu0 %770
    %v772 = vsel %vm235, %v732, 0.0
    %773 = vadd.xlane.f32.xlu0 %v772
    %v774 = vpop.xlane.xlu0 %773
    %v775 = vsel %vm235, %v733, 0.0
    %776 = vadd.xlane.f32.xlu0 %v775
    %v777 = vpop.xlane.xlu0 %776
    %v778 = vsel %vm235, %v734, 0.0
    %779 = vadd.xlane.f32.xlu0 %v778
    %v780 = vpop.xlane.xlu0 %779
    %v781 = vsel %vm235, %v735, 0.0
    %782 = vadd.xlane.f32.xlu0 %v781
    %v783 = vpop.xlane.xlu0 %782
    %s784 = sld [smem:[#allocation2]]
    %v785 = vstv %s784
    %v786 = vadd.f32 %v738, %v785
    %v787 = vadd.f32 %v741, %v785
    %v788 = vadd.f32 %v744, %v785
    %v789 = vadd.f32 %v747, %v785
    %v790 = vadd.f32 %v750, %v785
    %v791 = vadd.f32 %v753, %v785
    %v792 = vadd.f32 %v756, %v785
    %v793 = vadd.f32 %v759, %v785
    %v794 = vadd.f32 %v762, %v785
    %v795 = vadd.f32 %v765, %v785
    %v796 = vadd.f32 %v768, %v785
    %v797 = vadd.f32 %v771, %v785
    %v798 = vadd.f32 %v774, %v785
    %v799 = vadd.f32 %v777, %v785
    %v800 = vadd.f32 %v780, %v785
    %v801 = vadd.f32 %v783, %v785
    %v818 = vlaneseq
    %v819 = vand.u32 %v818, 127
    %v820 = vlaneseq
    %v821 = vshrl.u32 %v820, 7
    %v822 = vsub.s32 %v819, %v821
    %v823 = vrot.slane %v786, %v822
    %v824 = vadd.s32 %v819, 4294967288
    %v825 = vlaneseq
    %v826 = vshrl.u32 %v825, 7
    %v827 = vsub.s32 %v824, %v826
    %v828 = vrot.slane %v787, %v827
    %vm829 = vcmask 130112
    %v830 = vsel %vm829, %v828, %v823
    %v831 = vadd.s32 %v819, 4294967280
    %v832 = vlaneseq
    %v833 = vshrl.u32 %v832, 7
    %v834 = vsub.s32 %v831, %v833
    %v835 = vrot.slane %v788, %v834
    %vm836 = vcmask 195712
    %v837 = vsel %vm836, %v835, %v830
    %v838 = vadd.s32 %v819, 4294967272
    %v839 = vlaneseq
    %v840 = vshrl.u32 %v839, 7
    %v841 = vsub.s32 %v838, %v840
    %v842 = vrot.slane %v789, %v841
    %vm843 = vcmask 261312
    %v844 = vsel %vm843, %v842, %v837
    %v845 = vadd.s32 %v819, 4294967264
    %v846 = vlaneseq
    %v847 = vshrl.u32 %v846, 7
    %v848 = vsub.s32 %v845, %v847
    %v849 = vrot.slane %v790, %v848
    %vm850 = vcmask 326912
    %v851 = vsel %vm850, %v849, %v844
    %v852 = vadd.s32 %v819, 4294967256
    %v853 = vlaneseq
    %v854 = vshrl.u32 %v853, 7
    %v855 = vsub.s32 %v852, %v854
    %v856 = vrot.slane %v791, %v855
    %vm857 = vcmask 392512
    %v858 = vsel %vm857, %v856, %v851
    %v859 = vadd.s32 %v819, 4294967248
    %v860 = vlaneseq
    %v861 = vshrl.u32 %v860, 7
    %v862 = vsub.s32 %v859, %v861
    %v863 = vrot.slane %v792, %v862
    %vm864 = vcmask 458112
    %v865 = vsel %vm864, %v863, %v858
    %v866 = vadd.s32 %v819, 4294967240
    %v867 = vlaneseq
    %v868 = vshrl.u32 %v867, 7
    %v869 = vsub.s32 %v866, %v868
    %v870 = vrot.slane %v793, %v869
    %vm871 = vcmask 523712
    %v872 = vsel %vm871, %v870, %v865
    %v873 = vadd.s32 %v819, 4294967232
    %v874 = vlaneseq
    %v875 = vshrl.u32 %v874, 7
    %v876 = vsub.s32 %v873, %v875
    %v877 = vrot.slane %v794, %v876
    %vm878 = vcmask 589312
    %v879 = vsel %vm878, %v877, %v872
    %v880 = vadd.s32 %v819, 4294967224
    %v881 = vlaneseq
    %v882 = vshrl.u32 %v881, 7
    %v883 = vsub.s32 %v880, %v882
    %v884 = vrot.slane %v795, %v883
    %vm885 = vcmask 654912
    %v886 = vsel %vm885, %v884, %v879
    %v887 = vadd.s32 %v819, 4294967216
    %v888 = vlaneseq
    %v889 = vshrl.u32 %v888, 7
    %v890 = vsub.s32 %v887, %v889
    %v891 = vrot.slane %v796, %v890
    %vm892 = vcmask 720512
    %v893 = vsel %vm892, %v891, %v886
    %v894 = vadd.s32 %v819, 4294967208
    %v895 = vlaneseq
    %v896 = vshrl.u32 %v895, 7
    %v897 = vsub.s32 %v894, %v896
    %v898 = vrot.slane %v797, %v897
    %vm899 = vcmask 786112
    %v900 = vsel %vm899, %v898, %v893
    %v901 = vadd.s32 %v819, 4294967200
    %v902 = vlaneseq
    %v903 = vshrl.u32 %v902, 7
    %v904 = vsub.s32 %v901, %v903
    %v905 = vrot.slane %v798, %v904
    %vm906 = vcmask 851712
    %v907 = vsel %vm906, %v905, %v900
    %v908 = vadd.s32 %v819, 4294967192
    %v909 = vlaneseq
    %v910 = vshrl.u32 %v909, 7
    %v911 = vsub.s32 %v908, %v910
    %v912 = vrot.slane %v799, %v911
    %vm913 = vcmask 917312
    %v914 = vsel %vm913, %v912, %v907
    %v915 = vadd.s32 %v819, 4294967184
    %v916 = vlaneseq
    %v917 = vshrl.u32 %v916, 7
    %v918 = vsub.s32 %v915, %v917
    %v919 = vrot.slane %v800, %v918
    %vm920 = vcmask 982912
    %v921 = vsel %vm920, %v919, %v914
    %v922 = vadd.s32 %v819, 4294967176
    %v923 = vlaneseq
    %v924 = vshrl.u32 %v923, 7
    %v925 = vsub.s32 %v922, %v924
    %v926 = vrot.slane %v801, %v925
    %vm927 = vcmask 1048512
    %v928 = vsel %vm927, %v926, %v921
    %930 = vst [vmem:[#allocation3] sm:$0x1] %v928
    // Predicated region
    $region26: #{tpu_custom_call.1} parent=1 // pred_check
      _
    $region27: #{tpu_custom_call.1} parent=1 // pred_check_branch
      %932 = sbr.rel (0) target = $region29
    $region28: #{tpu_custom_call.1} parent=1 // pred_region
      %s934 = ssub.s32 16, 16
      %935 = vsyncadd [#allocation4], %s934
      %s937 = sshll.u32 [#allocation3], 4
      %s938 = int_to_ptr.vmem [resolvable:$true] %s937
      %940 = dma.vmem_to_hbm [thread:$0]  %s938, 16, %s6, [#allocation4]
    $region29: #{tpu_custom_call.1} parent=1 // pred_fallthru
      _
    // Predicated region
    $region30: #{tpu_custom_call.1} parent=1 // pred_check
      _
    $region31: #{tpu_custom_call.1} parent=1 // pred_check_branch
      %942 = sbr.rel (0) target = $region33
    $region32: #{tpu_custom_call.1} parent=1 // pred_region
      %943 = dma.done [#allocation4], 16
    $region33: #{tpu_custom_call.1} parent=1 // pred_fallthru
      _
    %944 = vsyncpa [#allocation4], 1

// kernel: tpu_custom_call.1
$region0: #{tpu_custom_call.1}
  #allocation0 [shape = 'u32[]', space=smem, size = 0x4, offset = 0x4, fixed_abs, tag = 'smem constant byte address 0x4 - core index']
  #allocation1 [shape = 'u32[144,128]{1,0:T(1,128)}', space=vmem, size = 0x12000, scoped, tag = 'internal scratch']
  #allocation2 [shape = 'f32[1,1]{1,0:T(1,128)S(6)}', space=smem, size = 0x200, scoped, tag = 'scoped memory for tpu_custom_call.1']
  %s0 = inlined_call_operand.vmem [shape: f32[128,16], index: 0, kind: input, shape index: {}]
  %s1 = inlined_call_operand.vmem [shape: bf16[16,32], index: 1, kind: input, shape index: {}]
  %s2 = inlined_call_operand.vmem [shape: bf16[3,32,32], index: 2, kind: input, shape index: {}]
  %s3 = inlined_call_operand.vmem [shape: f32[4,1,32], index: 3, kind: input, shape index: {}]
  %s4 = inlined_call_operand.vmem [shape: f32[1,32], index: 4, kind: input, shape index: {}]
  %s5 = inlined_call_operand.<no memory space> [shape: f32[1,1], index: 5, kind: input, shape index: {}]
  %s6 = inlined_call_operand.vmem [shape: f32[128,1], index: 6, kind: output, shape index: {}]
  %s7 = sld [smem:[#allocation0]]
  $region34: #{tpu_custom_call.1} parent=0
    _
  %s9 = ssub.s32 1, %s7
  %s10 = scalar_select 0, %s9, %s7
  %11 = sst [smem:[#allocation2]] %s5
  // Predicated region
  $region2: #{tpu_custom_call.1} parent=0 // pred_check
    _
  $region3: #{tpu_custom_call.1} parent=0 // pred_check_branch
    %13 = sbr.rel (0) target = $region5
  $region4: #{tpu_custom_call.1} parent=0 // pred_region
    _
  $region5: #{tpu_custom_call.1} parent=0 // pred_fallthru
    _
  // Predicated region
  $region6: #{tpu_custom_call.1} parent=0 // pred_check
    _
  $region7: #{tpu_custom_call.1} parent=0 // pred_check_branch
    %15 = sbr.rel (0) target = $region9
  $region8: #{tpu_custom_call.1} parent=0 // pred_region
    _
  $region9: #{tpu_custom_call.1} parent=0 // pred_fallthru
    _
  // Predicated region
  $region10: #{tpu_custom_call.1} parent=0 // pred_check
    _
  $region11: #{tpu_custom_call.1} parent=0 // pred_check_branch
    %17 = sbr.rel (0) target = $region13
  $region12: #{tpu_custom_call.1} parent=0 // pred_region
    _
  $region13: #{tpu_custom_call.1} parent=0 // pred_fallthru
    _
  // Predicated region
  $region14: #{tpu_custom_call.1} parent=0 // pred_check
    _
  $region15: #{tpu_custom_call.1} parent=0 // pred_check_branch
    %19 = sbr.rel (0) target = $region17
  $region16: #{tpu_custom_call.1} parent=0 // pred_region
    _
  $region17: #{tpu_custom_call.1} parent=0 // pred_fallthru
    _
  // Predicated region
  $region18: #{tpu_custom_call.1} parent=0 // pred_check
    _
  $region19: #{tpu_custom_call.1} parent=0 // pred_check_branch
    %21 = sbr.rel (0) target = $region21
  $region20: #{tpu_custom_call.1} parent=0 // pred_region
    _
  $region21: #{tpu_custom_call.1} parent=0 // pred_fallthru
    _
  // Predicated region
  $region22: #{tpu_custom_call.1} parent=0 // pred_check
    _
  $region23: #{tpu_custom_call.1} parent=0 // pred_check_branch
    %23 = sbr.rel (0) target = $region25
  $region24: #{tpu_custom_call.1} parent=0 // pred_region
    _
  $region25: #{tpu_custom_call.1} parent=0 // pred_fallthru
    _
  %v25 = vld [vmem:[%s0] sm:$0xff]
  %v26 = vld [vmem:[%s0 + $0x8] sm:$0xff]
  %v27 = vld [vmem:[%s0 + $0x10] sm:$0xff]
  %v28 = vld [vmem:[%s0 + $0x18] sm:$0xff]
  %v29 = vld [vmem:[%s0 + $0x20] sm:$0xff]
  %v30 = vld [vmem:[%s0 + $0x28] sm:$0xff]
  %v31 = vld [vmem:[%s0 + $0x30] sm:$0xff]
  %v32 = vld [vmem:[%s0 + $0x38] sm:$0xff]
  %v33 = vld [vmem:[%s0 + $0x40] sm:$0xff]
  %v34 = vld [vmem:[%s0 + $0x48] sm:$0xff]
  %v35 = vld [vmem:[%s0 + $0x50] sm:$0xff]
  %v36 = vld [vmem:[%s0 + $0x58] sm:$0xff]
  %v37 = vld [vmem:[%s0 + $0x60] sm:$0xff]
  %v38 = vld [vmem:[%s0 + $0x68] sm:$0xff]
  %v39 = vld [vmem:[%s0 + $0x70] sm:$0xff]
  %v40 = vld [vmem:[%s0 + $0x78] sm:$0xff]
  %v41 = vpack.c.bf16 %v26, %v25
  %v42 = vpack.c.bf16 %v28, %v27
  %v43 = vpack.c.bf16 %v30, %v29
  %v44 = vpack.c.bf16 %v32, %v31
  %v45 = vpack.c.bf16 %v34, %v33
  %v46 = vpack.c.bf16 %v36, %v35
  %v47 = vpack.c.bf16 %v38, %v37
  %v48 = vpack.c.bf16 %v40, %v39
  %v49 = vld [vmem:[%s1] sm:$0xf]
  %v50 = vld [vmem:[%s1 + $0x4] sm:$0xf]
  %v51 = vld [vmem:[%s3] sm:$0x1]
  %v53 = vlaneseq
  %v54 = vshrl.u32 %v53, 7
  %v55 = vsub.s32 0, %v54
  %v56 = vrot.slane %v51, %v55
  %v60 = vunpack.c.l.b16 %v49
  %v61 = vunpack.c.l.b16 %v50
  %v62 = vpack.c.b16 %v61, %v60
  %vm64 = vcmask 130048
  %v66 = vsel %vm64, %v41, 0
  %v69 = vsel %vm64, %v42, 0
  %v72 = vsel %vm64, %v43, 0
  %v75 = vsel %vm64, %v44, 0
  %v78 = vsel %vm64, %v45, 0
  %v81 = vsel %vm64, %v46, 0
  %v84 = vsel %vm64, %v47, 0
  %v87 = vsel %vm64, %v48, 0
  %89 = vmatprep.subr.bf16.mxu0 0
  %90 = vmatpush1.bf16.msra.mxu0 %v62
  %91 = vmatprep.subr.bf16.mxu0 0
  %92 = vmatpush1.bf16.msra.mxu0 0
  %93 = vmatprep.subr.bf16.mxu0 0
  %94 = vmatpush1.bf16.msra.mxu0 0
  %95 = vmatprep.subr.bf16.mxu0 0
  %96 = vmatpush1.bf16.msra.mxu0 0
  %97 = vmatprep.subr.bf16.mxu0 0
  %98 = vmatpush1.bf16.msra.mxu0 0
  %99 = vmatprep.subr.bf16.mxu0 0
  %100 = vmatpush1.bf16.msra.mxu0 0
  %101 = vmatprep.subr.bf16.mxu0 0
  %102 = vmatpush1.bf16.msra.mxu0 0
  %103 = vmatprep.subr.bf16.mxu0 0
  %104 = vmatpush1.bf16.msra.mxu0 0
  %105 = vmatprep.subr.bf16.mxu0 0
  %106 = vmatpush1.bf16.msra.mxu0 0
  %107 = vmatprep.subr.bf16.mxu0 0
  %108 = vmatpush1.bf16.msra.mxu0 0
  %109 = vmatprep.subr.bf16.mxu0 0
  %110 = vmatpush1.bf16.msra.mxu0 0
  %111 = vmatprep.subr.bf16.mxu0 0
  %112 = vmatpush1.bf16.msra.mxu0 0
  %113 = vmatprep.subr.bf16.mxu0 0
  %114 = vmatpush1.bf16.msra.mxu0 0
  %115 = vmatprep.subr.bf16.mxu0 0
  %116 = vmatpush1.bf16.msra.mxu0 0
  %117 = vmatprep.subr.bf16.mxu0 0
  %118 = vmatpush1.bf16.msra.mxu0 0
  %119 = vmatprep.subr.bf16.mxu0 0
  %120 = vmatpush1.bf16.msra.mxu0 0
  %121 = vmatprep.mubr.bf16.mxu0 0
  %122 = vmatmul.mubr.bf16.gmra.mrb[0].mxu0 %v66
  %v123 = vpop.f32.mrb[0].mxu0
  %v124 = vadd.f32 %v56, %v123
  %v125 = vpop.f32.mrb[0].mxu0
  %v126 = vpop.f32.mrb[0].mxu0
  %v127 = vadd.f32 %v56, %v126
  %v128 = vpop.f32.mrb[0].mxu0
  %129 = vmatprep.mubr.bf16.mxu0 0
  %130 = vmatmul.mubr.bf16.gmra.mrb[0].mxu0 %v69
  %v131 = vpop.f32.mrb[0].mxu0
  %v132 = vadd.f32 %v56, %v131
  %v133 = vpop.f32.mrb[0].mxu0
  %v134 = vpop.f32.mrb[0].mxu0
  %v135 = vadd.f32 %v56, %v134
  %v136 = vpop.f32.mrb[0].mxu0
  %137 = vmatprep.mubr.bf16.mxu0 0
  %138 = vmatmul.mubr.bf16.gmra.mrb[0].mxu0 %v72
  %v139 = vpop.f32.mrb[0].mxu0
  %v140 = vadd.f32 %v56, %v139
  %v141 = vpop.f32.mrb[0].mxu0
  %v142 = vpop.f32.mrb[0].mxu0
  %v143 = vadd.f32 %v56, %v142
  %v144 = vpop.f32.mrb[0].mxu0
  %145 = vmatprep.mubr.bf16.mxu0 0
  %146 = vmatmul.mubr.bf16.gmra.mrb[0].mxu0 %v75
  %v147 = vpop.f32.mrb[0].mxu0
  %v148 = vadd.f32 %v56, %v147
  %v149 = vpop.f32.mrb[0].mxu0
  %v150 = vpop.f32.mrb[0].mxu0
  %v151 = vadd.f32 %v56, %v150
  %v152 = vpop.f32.mrb[0].mxu0
  %153 = vmatprep.mubr.bf16.mxu0 0
  %154 = vmatmul.mubr.bf16.gmra.mrb[0].mxu0 %v78
  %v155 = vpop.f32.mrb[0].mxu0
  %v156 = vadd.f32 %v56, %v155
  %v157 = vpop.f32.mrb[0].mxu0
  %v158 = vpop.f32.mrb[0].mxu0
  %v159 = vadd.f32 %v56, %v158
  %v160 = vpop.f32.mrb[0].mxu0
  %161 = vmatprep.mubr.bf16.mxu0 0
  %162 = vmatmul.mubr.bf16.gmra.mrb[0].mxu0 %v81
  %v163 = vpop.f32.mrb[0].mxu0
  %v164 = vadd.f32 %v56, %v163
  %v165 = vpop.f32.mrb[0].mxu0
  %v166 = vpop.f32.mrb[0].mxu0
  %v167 = vadd.f32 %v56, %v166
  %v168 = vpop.f32.mrb[0].mxu0
  %169 = vmatprep.mubr.bf16.mxu0 0
  %170 = vmatmul.mubr.bf16.gmra.mrb[0].mxu0 %v84
  %v171 = vpop.f32.mrb[0].mxu0
  %v172 = vadd.f32 %v56, %v171
  %v173 = vpop.f32.mrb[0].mxu0
  %v174 = vpop.f32.mrb[0].mxu0
  %v175 = vadd.f32 %v56, %v174
  %v176 = vpop.f32.mrb[0].mxu0
  %177 = vmatprep.mubr.bf16.mxu0 0
  %178 = vmatmul.mubr.bf16.gmra.mrb[0].mxu0 %v87
  %v179 = vpop.f32.mrb[0].mxu0
  %v180 = vadd.f32 %v56, %v179
  %v181 = vpop.f32.mrb[0].mxu0
  %v182 = vpop.f32.mrb[0].mxu0
  %v183 = vadd.f32 %v56, %v182
  %v184 = vpop.f32.mrb[0].mxu0
  %185 = vdwg.mxu0
  %v186 = vmax.f32 %v124, 0.0
  %v187 = vmax.f32 %v127, 0.0
  %v188 = vmax.f32 %v132, 0.0
  %v189 = vmax.f32 %v135, 0.0
  %v190 = vmax.f32 %v140, 0.0
  %v191 = vmax.f32 %v143, 0.0
  %v192 = vmax.f32 %v148, 0.0
  %v193 = vmax.f32 %v151, 0.0
  %v194 = vmax.f32 %v156, 0.0
  %v195 = vmax.f32 %v159, 0.0
  %v196 = vmax.f32 %v164, 0.0
  %v197 = vmax.f32 %v167, 0.0
  %v198 = vmax.f32 %v172, 0.0
  %v199 = vmax.f32 %v175, 0.0
  %v200 = vmax.f32 %v180, 0.0
  %v201 = vmax.f32 %v183, 0.0
  %v202 = vpack.c.bf16 %v187, %v186
  %v203 = vpack.c.bf16 %v189, %v188
  %v204 = vpack.c.bf16 %v191, %v190
  %v205 = vpack.c.bf16 %v193, %v192
  %v206 = vpack.c.bf16 %v195, %v194
  %v207 = vpack.c.bf16 %v197, %v196
  %v208 = vpack.c.bf16 %v199, %v198
  %v209 = vpack.c.bf16 %v201, %v200
  %v210 = vld [vmem:[%s2] sm:$0xf]
  %v211 = vld [vmem:[%s2 + $0x4] sm:$0xf]
  %v212 = vld [vmem:[%s2 + $0x8] sm:$0xf]
  %v213 = vld [vmem:[%s2 + $0xc] sm:$0xf]
  %s214 = scalar_lea.vmem %s3, 1
  %v215 = vld [vmem:[%s214] sm:$0x1]
  %v217 = vlaneseq
  %v218 = vshrl.u32 %v217, 7
  %v219 = vsub.s32 0, %v218
  %v220 = vrot.slane %v215, %v219
  %v226 = vunpack.c.l.b16 %v210
  %v227 = vunpack.c.l.b16 %v211
  %v228 = vunpack.c.l.b16 %v212
  %v229 = vunpack.c.l.b16 %v213
  %v230 = vpack.c.b16 %v227, %v226
  %v231 = vpack.c.b16 %v229, %v228
  %vm234 = vcmask 261120
  %v236 = vsel %vm234, %v202, 0
  %v239 = vsel %vm234, %v203, 0
  %v242 = vsel %vm234, %v204, 0
  %v245 = vsel %vm234, %v205, 0
  %v248 = vsel %vm234, %v206, 0
  %v251 = vsel %vm234, %v207, 0
  %v254 = vsel %vm234, %v208, 0
  %v257 = vsel %vm234, %v209, 0
  %259 = vmatprep.subr.bf16.mxu0 0
  %260 = vmatpush1.bf16.msra.mxu0 %v230
  %261 = vmatprep.subr.bf16.mxu0 0
  %262 = vmatpush1.bf16.msra.mxu0 %v231
  %263 = vmatprep.subr.bf16.mxu0 0
  %264 = vmatpush1.bf16.msra.mxu0 0
  %265 = vmatprep.subr.bf16.mxu0 0
  %266 = vmatpush1.bf16.msra.mxu0 0
  %267 = vmatprep.subr.bf16.mxu0 0
  %268 = vmatpush1.bf16.msra.mxu0 0
  %269 = vmatprep.subr.bf16.mxu0 0
  %270 = vmatpush1.bf16.msra.mxu0 0
  %271 = vmatprep.subr.bf16.mxu0 0
  %272 = vmatpush1.bf16.msra.mxu0 0
  %273 = vmatprep.subr.bf16.mxu0 0
  %274 = vmatpush1.bf16.msra.mxu0 0
  %275 = vmatprep.subr.bf16.mxu0 0
  %276 = vmatpush1.bf16.msra.mxu0 0
  %277 = vmatprep.subr.bf16.mxu0 0
  %278 = vmatpush1.bf16.msra.mxu0 0
  %279 = vmatprep.subr.bf16.mxu0 0
  %280 = vmatpush1.bf16.msra.mxu0 0
  %281 = vmatprep.subr.bf16.mxu0 0
  %282 = vmatpush1.bf16.msra.mxu0 0
  %283 = vmatprep.subr.bf16.mxu0 0
  %284 = vmatpush1.bf16.msra.mxu0 0
  %285 = vmatprep.subr.bf16.mxu0 0
  %286 = vmatpush1.bf16.msra.mxu0 0
  %287 = vmatprep.subr.bf16.mxu0 0
  %288 = vmatpush1.bf16.msra.mxu0 0
  %289 = vmatprep.subr.bf16.mxu0 0
  %290 = vmatpush1.bf16.msra.mxu0 0
  %291 = vmatprep.mubr.bf16.mxu0 0
  %292 = vmatmul.mubr.bf16.gmra.mrb[0].mxu0 %v236
  %v293 = vpop.f32.mrb[0].mxu0
  %v294 = vadd.f32 %v220, %v293
  %v295 = vpop.f32.mrb[0].mxu0
  %v296 = vpop.f32.mrb[0].mxu0
  %v297 = vadd.f32 %v220, %v296
  %v298 = vpop.f32.mrb[0].mxu0
  %299 = vmatprep.mubr.bf16.mxu0 0
  %300 = vmatmul.mubr.bf16.gmra.mrb[0].mxu0 %v239
  %v301 = vpop.f32.mrb[0].mxu0
  %v302 = vadd.f32 %v220, %v301
  %v303 = vpop.f32.mrb[0].mxu0
  %v304 = vpop.f32.mrb[0].mxu0
  %v305 = vadd.f32 %v220, %v304
  %v306 = vpop.f32.mrb[0].mxu0
  %307 = vmatprep.mubr.bf16.mxu0 0
  %308 = vmatmul.mubr.bf16.gmra.mrb[0].mxu0 %v242
  %v309 = vpop.f32.mrb[0].mxu0
  %v310 = vadd.f32 %v220, %v309
  %v311 = vpop.f32.mrb[0].mxu0
  %v312 = vpop.f32.mrb[0].mxu0
  %v313 = vadd.f32 %v220, %v312
  %v314 = vpop.f32.mrb[0].mxu0
  %315 = vmatprep.mubr.bf16.mxu0 0
  %316 = vmatmul.mubr.bf16.gmra.mrb[0].mxu0 %v245
  %v317 = vpop.f32.mrb[0].mxu0
  %v318 = vadd.f32 %v220, %v317
  %v319 = vpop.f32.mrb[0].mxu0
  %v320 = vpop.f32.mrb[0].mxu0
  %v321 = vadd.f32 %v220, %v320
  %v322 = vpop.f32.mrb[0].mxu0
  %323 = vmatprep.mubr.bf16.mxu0 0
  %324 = vmatmul.mubr.bf16.gmra.mrb[0].mxu0 %v248
  %v325 = vpop.f32.mrb[0].mxu0
  %v326 = vadd.f32 %v220, %v325
  %v327 = vpop.f32.mrb[0].mxu0
  %v328 = vpop.f32.mrb[0].mxu0
  %v329 = vadd.f32 %v220, %v328
  %v330 = vpop.f32.mrb[0].mxu0
  %331 = vmatprep.mubr.bf16.mxu0 0
  %332 = vmatmul.mubr.bf16.gmra.mrb[0].mxu0 %v251
  %v333 = vpop.f32.mrb[0].mxu0
  %v334 = vadd.f32 %v220, %v333
  %v335 = vpop.f32.mrb[0].mxu0
  %v336 = vpop.f32.mrb[0].mxu0
  %v337 = vadd.f32 %v220, %v336
  %v338 = vpop.f32.mrb[0].mxu0
  %339 = vmatprep.mubr.bf16.mxu0 0
  %340 = vmatmul.mubr.bf16.gmra.mrb[0].mxu0 %v254
  %v341 = vpop.f32.mrb[0].mxu0
  %v342 = vadd.f32 %v220, %v341
  %v343 = vpop.f32.mrb[0].mxu0
  %v344 = vpop.f32.mrb[0].mxu0
  %v345 = vadd.f32 %v220, %v344
  %v346 = vpop.f32.mrb[0].mxu0
  %347 = vmatprep.mubr.bf16.mxu0 0
  %348 = vmatmul.mubr.bf16.gmra.mrb[0].mxu0 %v257
  %v349 = vpop.f32.mrb[0].mxu0
  %v350 = vadd.f32 %v220, %v349
  %v351 = vpop.f32.mrb[0].mxu0
  %v352 = vpop.f32.mrb[0].mxu0
  %v353 = vadd.f32 %v220, %v352
  %v354 = vpop.f32.mrb[0].mxu0
  %355 = vdwg.mxu0
  %v356 = vmax.f32 %v294, 0.0
  %v357 = vmax.f32 %v297, 0.0
  %v358 = vmax.f32 %v302, 0.0
  %v359 = vmax.f32 %v305, 0.0
  %v360 = vmax.f32 %v310, 0.0
  %v361 = vmax.f32 %v313, 0.0
  %v362 = vmax.f32 %v318, 0.0
  %v363 = vmax.f32 %v321, 0.0
  %v364 = vmax.f32 %v326, 0.0
  %v365 = vmax.f32 %v329, 0.0
  %v366 = vmax.f32 %v334, 0.0
  %v367 = vmax.f32 %v337, 0.0
  %v368 = vmax.f32 %v342, 0.0
  %v369 = vmax.f32 %v345, 0.0
  %v370 = vmax.f32 %v350, 0.0
  %v371 = vmax.f32 %v353, 0.0
  %v372 = vpack.c.bf16 %v357, %v356
  %v373 = vpack.c.bf16 %v359, %v358
  %v374 = vpack.c.bf16 %v361, %v360
  %v375 = vpack.c.bf16 %v363, %v362
  %v376 = vpack.c.bf16 %v365, %v364
  %v377 = vpack.c.bf16 %v367, %v366
  %v378 = vpack.c.bf16 %v369, %v368
  %v379 = vpack.c.bf16 %v371, %v370
  %s380 = scalar_lea.vmem %s2, 16
  %v381 = vld [vmem:[%s380] sm:$0xf]
  %v382 = vld [vmem:[%s380 + $0x4] sm:$0xf]
  %v383 = vld [vmem:[%s380 + $0x8] sm:$0xf]
  %v384 = vld [vmem:[%s380 + $0xc] sm:$0xf]
  %s385 = scalar_lea.vmem %s3, 2
  %v386 = vld [vmem:[%s385] sm:$0x1]
  %v388 = vlaneseq
  %v389 = vshrl.u32 %v388, 7
  %v390 = vsub.s32 0, %v389
  %v391 = vrot.slane %v386, %v390
  %v397 = vunpack.c.l.b16 %v381
  %v398 = vunpack.c.l.b16 %v382
  %v399 = vunpack.c.l.b16 %v383
  %v400 = vunpack.c.l.b16 %v384
  %v401 = vpack.c.b16 %v398, %v397
  %v402 = vpack.c.b16 %v400, %v399
  %v406 = vsel %vm234, %v372, 0
  %v409 = vsel %vm234, %v373, 0
  %v412 = vsel %vm234, %v374, 0
  %v415 = vsel %vm234, %v375, 0
  %v418 = vsel %vm234, %v376, 0
  %v421 = vsel %vm234, %v377, 0
  %v424 = vsel %vm234, %v378, 0
  %v427 = vsel %vm234, %v379, 0
  %429 = vmatprep.subr.bf16.mxu0 0
  %430 = vmatpush1.bf16.msra.mxu0 %v401
  %431 = vmatprep.subr.bf16.mxu0 0
  %432 = vmatpush1.bf16.msra.mxu0 %v402
  %433 = vmatprep.subr.bf16.mxu0 0
  %434 = vmatpush1.bf16.msra.mxu0 0
  %435 = vmatprep.subr.bf16.mxu0 0
  %436 = vmatpush1.bf16.msra.mxu0 0
  %437 = vmatprep.subr.bf16.mxu0 0
  %438 = vmatpush1.bf16.msra.mxu0 0
  %439 = vmatprep.subr.bf16.mxu0 0
  %440 = vmatpush1.bf16.msra.mxu0 0
  %441 = vmatprep.subr.bf16.mxu0 0
  %442 = vmatpush1.bf16.msra.mxu0 0
  %443 = vmatprep.subr.bf16.mxu0 0
  %444 = vmatpush1.bf16.msra.mxu0 0
  %445 = vmatprep.subr.bf16.mxu0 0
  %446 = vmatpush1.bf16.msra.mxu0 0
  %447 = vmatprep.subr.bf16.mxu0 0
  %448 = vmatpush1.bf16.msra.mxu0 0
  %449 = vmatprep.subr.bf16.mxu0 0
  %450 = vmatpush1.bf16.msra.mxu0 0
  %451 = vmatprep.subr.bf16.mxu0 0
  %452 = vmatpush1.bf16.msra.mxu0 0
  %453 = vmatprep.subr.bf16.mxu0 0
  %454 = vmatpush1.bf16.msra.mxu0 0
  %455 = vmatprep.subr.bf16.mxu0 0
  %456 = vmatpush1.bf16.msra.mxu0 0
  %457 = vmatprep.subr.bf16.mxu0 0
  %458 = vmatpush1.bf16.msra.mxu0 0
  %459 = vmatprep.subr.bf16.mxu0 0
  %460 = vmatpush1.bf16.msra.mxu0 0
  %461 = vmatprep.mubr.bf16.mxu0 0
  %462 = vmatmul.mubr.bf16.gmra.mrb[0].mxu0 %v406
  %v463 = vpop.f32.mrb[0].mxu0
  %v464 = vadd.f32 %v391, %v463
  %v465 = vpop.f32.mrb[0].mxu0
  %v466 = vpop.f32.mrb[0].mxu0
  %v467 = vadd.f32 %v391, %v466
  %v468 = vpop.f32.mrb[0].mxu0
  %469 = vmatprep.mubr.bf16.mxu0 0
  %470 = vmatmul.mubr.bf16.gmra.mrb[0].mxu0 %v409
  %v471 = vpop.f32.mrb[0].mxu0
  %v472 = vadd.f32 %v391, %v471
  %v473 = vpop.f32.mrb[0].mxu0
  %v474 = vpop.f32.mrb[0].mxu0
  %v475 = vadd.f32 %v391, %v474
  %v476 = vpop.f32.mrb[0].mxu0
  %477 = vmatprep.mubr.bf16.mxu0 0
  %478 = vmatmul.mubr.bf16.gmra.mrb[0].mxu0 %v412
  %v479 = vpop.f32.mrb[0].mxu0
  %v480 = vadd.f32 %v391, %v479
  %v481 = vpop.f32.mrb[0].mxu0
  %v482 = vpop.f32.mrb[0].mxu0
  %v483 = vadd.f32 %v391, %v482
  %v484 = vpop.f32.mrb[0].mxu0
  %485 = vmatprep.mubr.bf16.mxu0 0
  %486 = vmatmul.mubr.bf16.gmra.mrb[0].mxu0 %v415
  %v487 = vpop.f32.mrb[0].mxu0
  %v488 = vadd.f32 %v391, %v487
  %v489 = vpop.f32.mrb[0].mxu0
  %v490 = vpop.f32.mrb[0].mxu0
  %v491 = vadd.f32 %v391, %v490
  %v492 = vpop.f32.mrb[0].mxu0
  %493 = vmatprep.mubr.bf16.mxu0 0
  %494 = vmatmul.mubr.bf16.gmra.mrb[0].mxu0 %v418
  %v495 = vpop.f32.mrb[0].mxu0
  %v496 = vadd.f32 %v391, %v495
  %v497 = vpop.f32.mrb[0].mxu0
  %v498 = vpop.f32.mrb[0].mxu0
  %v499 = vadd.f32 %v391, %v498
  %v500 = vpop.f32.mrb[0].mxu0
  %501 = vmatprep.mubr.bf16.mxu0 0
  %502 = vmatmul.mubr.bf16.gmra.mrb[0].mxu0 %v421
  %v503 = vpop.f32.mrb[0].mxu0
  %v504 = vadd.f32 %v391, %v503
  %v505 = vpop.f32.mrb[0].mxu0
  %v506 = vpop.f32.mrb[0].mxu0
  %v507 = vadd.f32 %v391, %v506
  %v508 = vpop.f32.mrb[0].mxu0
  %509 = vmatprep.mubr.bf16.mxu0 0
  %510 = vmatmul.mubr.bf16.gmra.mrb[0].mxu0 %v424
  %v511 = vpop.f32.mrb[0].mxu0
  %v512 = vadd.f32 %v391, %v511
  %v513 = vpop.f32.mrb[0].mxu0
  %v514 = vpop.f32.mrb[0].mxu0
  %v515 = vadd.f32 %v391, %v514
  %v516 = vpop.f32.mrb[0].mxu0
  %517 = vmatprep.mubr.bf16.mxu0 0
  %518 = vmatmul.mubr.bf16.gmra.mrb[0].mxu0 %v427
  %v519 = vpop.f32.mrb[0].mxu0
  %v520 = vadd.f32 %v391, %v519
  %v521 = vpop.f32.mrb[0].mxu0
  %v522 = vpop.f32.mrb[0].mxu0
  %v523 = vadd.f32 %v391, %v522
  %v524 = vpop.f32.mrb[0].mxu0
  %525 = vdwg.mxu0
  %v526 = vmax.f32 %v464, 0.0
  %v527 = vmax.f32 %v467, 0.0
  %v528 = vmax.f32 %v472, 0.0
  %v529 = vmax.f32 %v475, 0.0
  %v530 = vmax.f32 %v480, 0.0
  %v531 = vmax.f32 %v483, 0.0
  %v532 = vmax.f32 %v488, 0.0
  %v533 = vmax.f32 %v491, 0.0
  %v534 = vmax.f32 %v496, 0.0
  %v535 = vmax.f32 %v499, 0.0
  %v536 = vmax.f32 %v504, 0.0
  %v537 = vmax.f32 %v507, 0.0
  %v538 = vmax.f32 %v512, 0.0
  %v539 = vmax.f32 %v515, 0.0
  %v540 = vmax.f32 %v520, 0.0
  %v541 = vmax.f32 %v523, 0.0
  %v542 = vpack.c.bf16 %v527, %v526
  %v543 = vpack.c.bf16 %v529, %v528
  %v544 = vpack.c.bf16 %v531, %v530
  %v545 = vpack.c.bf16 %v533, %v532
  %v546 = vpack.c.bf16 %v535, %v534
  %v547 = vpack.c.bf16 %v537, %v536
  %v548 = vpack.c.bf16 %v539, %v538
  %v549 = vpack.c.bf16 %v541, %v540
  %s550 = scalar_lea.vmem %s2, 32
  %v551 = vld [vmem:[%s550] sm:$0xf]
  %v552 = vld [vmem:[%s550 + $0x4] sm:$0xf]
  %v553 = vld [vmem:[%s550 + $0x8] sm:$0xf]
  %v554 = vld [vmem:[%s550 + $0xc] sm:$0xf]
  %s555 = scalar_lea.vmem %s3, 3
  %v556 = vld [vmem:[%s555] sm:$0x1]
  %v558 = vlaneseq
  %v559 = vshrl.u32 %v558, 7
  %v560 = vsub.s32 0, %v559
  %v561 = vrot.slane %v556, %v560
  %v567 = vunpack.c.l.b16 %v551
  %v568 = vunpack.c.l.b16 %v552
  %v569 = vunpack.c.l.b16 %v553
  %v570 = vunpack.c.l.b16 %v554
  %v571 = vpack.c.b16 %v568, %v567
  %v572 = vpack.c.b16 %v570, %v569
  %v576 = vsel %vm234, %v542, 0
  %v579 = vsel %vm234, %v543, 0
  %v582 = vsel %vm234, %v544, 0
  %v585 = vsel %vm234, %v545, 0
  %v588 = vsel %vm234, %v546, 0
  %v591 = vsel %vm234, %v547, 0
  %v594 = vsel %vm234, %v548, 0
  %v597 = vsel %vm234, %v549, 0
  %599 = vmatprep.subr.bf16.mxu0 0
  %600 = vmatpush1.bf16.msra.mxu0 %v571
  %601 = vmatprep.subr.bf16.mxu0 0
  %602 = vmatpush1.bf16.msra.mxu0 %v572
  %603 = vmatprep.subr.bf16.mxu0 0
  %604 = vmatpush1.bf16.msra.mxu0 0
  %605 = vmatprep.subr.bf16.mxu0 0
  %606 = vmatpush1.bf16.msra.mxu0 0
  %607 = vmatprep.subr.bf16.mxu0 0
  %608 = vmatpush1.bf16.msra.mxu0 0
  %609 = vmatprep.subr.bf16.mxu0 0
  %610 = vmatpush1.bf16.msra.mxu0 0
  %611 = vmatprep.subr.bf16.mxu0 0
  %612 = vmatpush1.bf16.msra.mxu0 0
  %613 = vmatprep.subr.bf16.mxu0 0
  %614 = vmatpush1.bf16.msra.mxu0 0
  %615 = vmatprep.subr.bf16.mxu0 0
  %616 = vmatpush1.bf16.msra.mxu0 0
  %617 = vmatprep.subr.bf16.mxu0 0
  %618 = vmatpush1.bf16.msra.mxu0 0
  %619 = vmatprep.subr.bf16.mxu0 0
  %620 = vmatpush1.bf16.msra.mxu0 0
  %621 = vmatprep.subr.bf16.mxu0 0
  %622 = vmatpush1.bf16.msra.mxu0 0
  %623 = vmatprep.subr.bf16.mxu0 0
  %624 = vmatpush1.bf16.msra.mxu0 0
  %625 = vmatprep.subr.bf16.mxu0 0
  %626 = vmatpush1.bf16.msra.mxu0 0
  %627 = vmatprep.subr.bf16.mxu0 0
  %628 = vmatpush1.bf16.msra.mxu0 0
  %629 = vmatprep.subr.bf16.mxu0 0
  %630 = vmatpush1.bf16.msra.mxu0 0
  %631 = vmatprep.mubr.bf16.mxu0 0
  %632 = vmatmul.mubr.bf16.gmra.mrb[0].mxu0 %v576
  %v633 = vpop.f32.mrb[0].mxu0
  %v634 = vadd.f32 %v561, %v633
  %v635 = vpop.f32.mrb[0].mxu0
  %v636 = vpop.f32.mrb[0].mxu0
  %v637 = vadd.f32 %v561, %v636
  %v638 = vpop.f32.mrb[0].mxu0
  %639 = vmatprep.mubr.bf16.mxu0 0
  %640 = vmatmul.mubr.bf16.gmra.mrb[0].mxu0 %v579
  %v641 = vpop.f32.mrb[0].mxu0
  %v642 = vadd.f32 %v561, %v641
  %v643 = vpop.f32.mrb[0].mxu0
  %v644 = vpop.f32.mrb[0].mxu0
  %v645 = vadd.f32 %v561, %v644
  %v646 = vpop.f32.mrb[0].mxu0
  %647 = vmatprep.mubr.bf16.mxu0 0
  %648 = vmatmul.mubr.bf16.gmra.mrb[0].mxu0 %v582
  %v649 = vpop.f32.mrb[0].mxu0
  %v650 = vadd.f32 %v561, %v649
  %v651 = vpop.f32.mrb[0].mxu0
  %v652 = vpop.f32.mrb[0].mxu0
  %v653 = vadd.f32 %v561, %v652
  %v654 = vpop.f32.mrb[0].mxu0
  %655 = vmatprep.mubr.bf16.mxu0 0
  %656 = vmatmul.mubr.bf16.gmra.mrb[0].mxu0 %v585
  %v657 = vpop.f32.mrb[0].mxu0
  %v658 = vadd.f32 %v561, %v657
  %v659 = vpop.f32.mrb[0].mxu0
  %v660 = vpop.f32.mrb[0].mxu0
  %v661 = vadd.f32 %v561, %v660
  %v662 = vpop.f32.mrb[0].mxu0
  %663 = vmatprep.mubr.bf16.mxu0 0
  %664 = vmatmul.mubr.bf16.gmra.mrb[0].mxu0 %v588
  %v665 = vpop.f32.mrb[0].mxu0
  %v666 = vadd.f32 %v561, %v665
  %v667 = vpop.f32.mrb[0].mxu0
  %v668 = vpop.f32.mrb[0].mxu0
  %v669 = vadd.f32 %v561, %v668
  %v670 = vpop.f32.mrb[0].mxu0
  %671 = vmatprep.mubr.bf16.mxu0 0
  %672 = vmatmul.mubr.bf16.gmra.mrb[0].mxu0 %v591
  %v673 = vpop.f32.mrb[0].mxu0
  %v674 = vadd.f32 %v561, %v673
  %v675 = vpop.f32.mrb[0].mxu0
  %v676 = vpop.f32.mrb[0].mxu0
  %v677 = vadd.f32 %v561, %v676
  %v678 = vpop.f32.mrb[0].mxu0
  %679 = vmatprep.mubr.bf16.mxu0 0
  %680 = vmatmul.mubr.bf16.gmra.mrb[0].mxu0 %v594
  %v681 = vpop.f32.mrb[0].mxu0
  %v682 = vadd.f32 %v561, %v681
  %v683 = vpop.f32.mrb[0].mxu0
  %v684 = vpop.f32.mrb[0].mxu0
  %v685 = vadd.f32 %v561, %v684
  %v686 = vpop.f32.mrb[0].mxu0
  %687 = vmatprep.mubr.bf16.mxu0 0
  %688 = vmatmul.mubr.bf16.gmra.mrb[0].mxu0 %v597
  %v689 = vpop.f32.mrb[0].mxu0
  %v690 = vadd.f32 %v561, %v689
  %v691 = vpop.f32.mrb[0].mxu0
  %v692 = vpop.f32.mrb[0].mxu0
  %v693 = vadd.f32 %v561, %v692
  %v694 = vpop.f32.mrb[0].mxu0
  %695 = vdwg.mxu0
  %v696 = vmax.f32 %v634, 0.0
  %v697 = vmax.f32 %v637, 0.0
  %v698 = vmax.f32 %v642, 0.0
  %v699 = vmax.f32 %v645, 0.0
  %v700 = vmax.f32 %v650, 0.0
  %v701 = vmax.f32 %v653, 0.0
  %v702 = vmax.f32 %v658, 0.0
  %v703 = vmax.f32 %v661, 0.0
  %v704 = vmax.f32 %v666, 0.0
  %v705 = vmax.f32 %v669, 0.0
  %v706 = vmax.f32 %v674, 0.0
  %v707 = vmax.f32 %v677, 0.0
  %v708 = vmax.f32 %v682, 0.0
  %v709 = vmax.f32 %v685, 0.0
  %v710 = vmax.f32 %v690, 0.0
  %v711 = vmax.f32 %v693, 0.0
  %v712 = vld [vmem:[%s4] sm:$0x1]
  %v714 = vlaneseq
  %v715 = vshrl.u32 %v714, 7
  %v716 = vsub.s32 0, %v715
  %v717 = vrot.slane %v712, %v716
  %v719 = vmul.f32 %v696, %v717
  %v720 = vmul.f32 %v697, %v717
  %v721 = vmul.f32 %v698, %v717
  %v722 = vmul.f32 %v699, %v717
  %v723 = vmul.f32 %v700, %v717
  %v724 = vmul.f32 %v701, %v717
  %v725 = vmul.f32 %v702, %v717
  %v726 = vmul.f32 %v703, %v717
  %v727 = vmul.f32 %v704, %v717
  %v728 = vmul.f32 %v705, %v717
  %v729 = vmul.f32 %v706, %v717
  %v730 = vmul.f32 %v707, %v717
  %v731 = vmul.f32 %v708, %v717
  %v732 = vmul.f32 %v709, %v717
  %v733 = vmul.f32 %v710, %v717
  %v734 = vmul.f32 %v711, %v717
  %v735 = vsel %vm234, %v719, 0.0
  %736 = vadd.xlane.f32.xlu0 %v735
  %v737 = vpop.xlane.xlu0 %736
  %v738 = vsel %vm234, %v720, 0.0
  %739 = vadd.xlane.f32.xlu0 %v738
  %v740 = vpop.xlane.xlu0 %739
  %v741 = vsel %vm234, %v721, 0.0
  %742 = vadd.xlane.f32.xlu0 %v741
  %v743 = vpop.xlane.xlu0 %742
  %v744 = vsel %vm234, %v722, 0.0
  %745 = vadd.xlane.f32.xlu0 %v744
  %v746 = vpop.xlane.xlu0 %745
  %v747 = vsel %vm234, %v723, 0.0
  %748 = vadd.xlane.f32.xlu0 %v747
  %v749 = vpop.xlane.xlu0 %748
  %v750 = vsel %vm234, %v724, 0.0
  %751 = vadd.xlane.f32.xlu0 %v750
  %v752 = vpop.xlane.xlu0 %751
  %v753 = vsel %vm234, %v725, 0.0
  %754 = vadd.xlane.f32.xlu0 %v753
  %v755 = vpop.xlane.xlu0 %754
  %v756 = vsel %vm234, %v726, 0.0
  %757 = vadd.xlane.f32.xlu0 %v756
  %v758 = vpop.xlane.xlu0 %757
  %v759 = vsel %vm234, %v727, 0.0
  %760 = vadd.xlane.f32.xlu0 %v759
  %v761 = vpop.xlane.xlu0 %760
  %v762 = vsel %vm234, %v728, 0.0
  %763 = vadd.xlane.f32.xlu0 %v762
  %v764 = vpop.xlane.xlu0 %763
  %v765 = vsel %vm234, %v729, 0.0
  %766 = vadd.xlane.f32.xlu0 %v765
  %v767 = vpop.xlane.xlu0 %766
  %v768 = vsel %vm234, %v730, 0.0
  %769 = vadd.xlane.f32.xlu0 %v768
  %v770 = vpop.xlane.xlu0 %769
  %v771 = vsel %vm234, %v731, 0.0
  %772 = vadd.xlane.f32.xlu0 %v771
  %v773 = vpop.xlane.xlu0 %772
  %v774 = vsel %vm234, %v732, 0.0
  %775 = vadd.xlane.f32.xlu0 %v774
  %v776 = vpop.xlane.xlu0 %775
  %v777 = vsel %vm234, %v733, 0.0
  %778 = vadd.xlane.f32.xlu0 %v777
  %v779 = vpop.xlane.xlu0 %778
  %v780 = vsel %vm234, %v734, 0.0
  %781 = vadd.xlane.f32.xlu0 %v780
  %v782 = vpop.xlane.xlu0 %781
  %s783 = sld [smem:[#allocation2]]
  %v784 = vstv %s783
  %v785 = vadd.f32 %v737, %v784
  %v786 = vadd.f32 %v740, %v784
  %v787 = vadd.f32 %v743, %v784
  %v788 = vadd.f32 %v746, %v784
  %v789 = vadd.f32 %v749, %v784
  %v790 = vadd.f32 %v752, %v784
  %v791 = vadd.f32 %v755, %v784
  %v792 = vadd.f32 %v758, %v784
  %v793 = vadd.f32 %v761, %v784
  %v794 = vadd.f32 %v764, %v784
  %v795 = vadd.f32 %v767, %v784
  %v796 = vadd.f32 %v770, %v784
  %v797 = vadd.f32 %v773, %v784
  %v798 = vadd.f32 %v776, %v784
  %v799 = vadd.f32 %v779, %v784
  %v800 = vadd.f32 %v782, %v784
  %vm801 = vcmask 7168
  %802 = vst.msk [vmem:[%s6] sm:$0xff] %vm801, %v785
  %803 = vst.msk [vmem:[%s6 + $0x8] sm:$0xff] %vm801, %v786
  %804 = vst.msk [vmem:[%s6 + $0x10] sm:$0xff] %vm801, %v787
  %805 = vst.msk [vmem:[%s6 + $0x18] sm:$0xff] %vm801, %v788
  %806 = vst.msk [vmem:[%s6 + $0x20] sm:$0xff] %vm801, %v789
  %807 = vst.msk [vmem:[%s6 + $0x28] sm:$0xff] %vm801, %v790
  %808 = vst.msk [vmem:[%s6 + $0x30] sm:$0xff] %vm801, %v791
  %809 = vst.msk [vmem:[%s6 + $0x38] sm:$0xff] %vm801, %v792
  %810 = vst.msk [vmem:[%s6 + $0x40] sm:$0xff] %vm801, %v793
  %811 = vst.msk [vmem:[%s6 + $0x48] sm:$0xff] %vm801, %v794
  %812 = vst.msk [vmem:[%s6 + $0x50] sm:$0xff] %vm801, %v795
  %813 = vst.msk [vmem:[%s6 + $0x58] sm:$0xff] %vm801, %v796
  %814 = vst.msk [vmem:[%s6 + $0x60] sm:$0xff] %vm801, %v797
  %815 = vst.msk [vmem:[%s6 + $0x68] sm:$0xff] %vm801, %v798
  %816 = vst.msk [vmem:[%s6 + $0x70] sm:$0xff] %vm801, %v799
  %817 = vst.msk [vmem:[%s6 + $0x78] sm:$0xff] %vm801, %v800
  // Predicated region
  $region26: #{tpu_custom_call.1} parent=0 // pred_check
    _
  $region27: #{tpu_custom_call.1} parent=0 // pred_check_branch
    %819 = sbr.rel (0) target = $region29
  $region28: #{tpu_custom_call.1} parent=0 // pred_region
    _
  $region29: #{tpu_custom_call.1} parent=0 // pred_fallthru
    _
  // Predicated region
  $region30: #{tpu_custom_call.1} parent=0 // pred_check
    _
  $region31: #{tpu_custom_call.1} parent=0 // pred_check_branch
    %821 = sbr.rel (0) target = $region33
  $region32: #{tpu_custom_call.1} parent=0 // pred_region
    _
  $region33: #{tpu_custom_call.1} parent=0 // pred_fallthru
    _

</llo_original>
